<compile_context>
chip_gen: v7x
topology: tpu7x:2x2x1
jax: 0.10.0
libtpu: 0.0.40
codegen_flags: <defaults>
</compile_context>

<pallas_src>
import numpy as np
import jax
import jax.numpy as jnp
from jax import lax
from jax.experimental import pallas as pl
from jax.experimental.pallas import tpu as pltpu

NUM_INPUTS = 39
NUM_CHANNELS = NUM_INPUTS // 13        # 3
FEAT_LEN = NUM_INPUTS // NUM_CHANNELS  # 13
NUM_CLASSES = 38
CLASSES_PAD = 128                      # lane-dense padded class dim

MAX_TB = 1024                          # batch-tile cap (safe for v5e/v6e/v7x VMEM)


def _r8(n):
    return ((n + 7) // 8) * 8


# ----------------------------- Pallas kernel ------------------------------ #

def cnn_kernel(x_ref, w1_ref, w2_ref, w3_ref, wf1_ref, wf2_ref,
               b1_ref, b2_ref, b3_ref, bf1_ref, bf2_ref, o_ref):
    mm = w1_ref.dtype                                # MXU operand dtype (f32/bf16)

    def dense(h, w_ref, b_ref, relu=True):
        acc = jnp.dot(h.astype(mm), w_ref[...],
                      preferred_element_type=jnp.float32) + b_ref[...]
        return jnp.maximum(acc, 0.0) if relu else acc

    x = x_ref[...]                                   # (TB, 39) f32, raw row layout
    h = dense(x, w1_ref, b1_ref)                     # conv1+ReLU -> (TB,256) [240 real]
    h = dense(h, w2_ref, b2_ref)                     # conv2+ReLU -> (TB,512) [even|odd]
    # MaxPool1d(2,2): max of even-position and odd-position column halves.
    # Dropout(p=0.25) is identity in eval mode.
    h = jnp.maximum(h[:, 0:256], h[:, 256:512])      # (TB, 256) [192 real]
    h = dense(h, w3_ref, b3_ref)                     # conv3+ReLU -> (TB,256) [pos0|pos1]
    h = jnp.maximum(h[:, 0:128], h[:, 128:256])      # pool + flatten -> (TB,128) [96 real]
    h = dense(h, wf1_ref, bf1_ref)                   # fc1+ReLU -> (TB, 256)
    logits = dense(h, wf2_ref, bf2_ref, relu=False)  # fc2 -> (TB, 128) [38 real]

    # LogSoftmax over lanes; pad lanes carry -1e30 bias -> exp underflows to 0.
    m = jnp.max(logits, axis=-1, keepdims=True)
    z = logits - m
    lse = jnp.log(jnp.sum(jnp.exp(z), axis=-1, keepdims=True))
    o_ref[...] = (z - lse).astype(o_ref.dtype)       # lane-dense (TB, 128) store


# ---------------------- host-side param packing (once) --------------------- #

def default_mm_dtype():
    """bf16 MXU operands on v6e/v7x; f32 on v5e and older (no bf16 VPU)."""
    kind = jax.devices()[0].device_kind.lower()
    if any(tag in kind for tag in ("v2", "v3", "v4", "v5")):
        return jnp.float32
    return jnp.bfloat16


def prepare_params(params, mm_dtype=None):
    """Pack weights into lane-dense block-Toeplitz matrices.  Call once at load."""
    if mm_dtype is None:
        mm_dtype = default_mm_dtype()
    w1, b1, w2, b2, w3, b3, wf1, bf1, wf2, bf2 = [
        np.asarray(p, np.float32) for p in params]

    # conv1: rows follow the raw x layout (c_in*13 + l_in); cols = l_out*24 + c_out,
    # padded 240 -> 256.
    W1 = np.zeros((NUM_INPUTS, 256), np.float32)
    B1 = np.zeros((1, 256), np.float32)
    for lo in range(10):
        for co in range(24):
            col = lo * 24 + co
            B1[0, col] = b1[co]
            for k in range(4):
                for ci in range(NUM_CHANNELS):
                    W1[ci * FEAT_LEN + lo + k, col] = w1[co, ci, k]

    # conv2: rows = l_in*24 + c_in (conv1 column layout); cols split even/odd output
    # positions (4*48 = 192 real lanes each, padded to 256) so MaxPool1d(2,2) is
    # max(cols[0:256], cols[256:512]).
    W2 = np.zeros((256, 512), np.float32)
    B2 = np.zeros((1, 512), np.float32)
    for lo in range(8):
        base = (lo % 2) * 256 + (lo // 2) * 48
        for co in range(48):
            col = base + co
            B2[0, col] = b2[co]
            for k in range(3):
                for ci in range(24):
                    W2[(lo + k) * 24 + ci, col] = w2[co, ci, k]

    # conv3: rows = pooled_pos*48 + c_in; cols = out_pos*128 + c_out (96 padded to
    # 128 per position) so the second pool is max(cols[0:128], cols[128:256]).
    W3 = np.zeros((256, 256), np.float32)
    B3 = np.zeros((1, 256), np.float32)
    for lo in range(2):
        for co in range(96):
            col = lo * 128 + co
            B3[0, col] = b3[co]
            for k in range(3):
                for ci in range(48):
                    W3[(lo + k) * 48 + ci, col] = w3[co, ci, k]

    # fc1: rows padded 96 -> 128 with zeros.
    WF1 = np.zeros((128, 256), np.float32)
    WF1[:96, :] = wf1.T
    BF1 = bf1.reshape(1, 256).copy()

    # fc2: cols padded 38 -> 128; pad-lane bias -1e30 so log-softmax ignores them.
    WF2 = np.zeros((256, CLASSES_PAD), np.float32)
    WF2[:, :NUM_CLASSES] = wf2.T
    BF2 = np.full((1, CLASSES_PAD), -1e30, np.float32)
    BF2[0, :NUM_CLASSES] = bf2

    weights = [jnp.asarray(m, mm_dtype) for m in (W1, W2, W3, WF1, WF2)]
    biases = [jnp.asarray(b, jnp.float32) for b in (B1, B2, B3, BF1, BF2)]
    return tuple(weights + biases)


# ------------------------------ host wrapper ------------------------------ #

def _default_weight_mode():
    try:
        return pl.Buffered(1)          # single-buffer grid-invariant operands
    except Exception:                  # pragma: no cover - older/newer API
        return None


_WEIGHT_PIPELINE = [_default_weight_mode()]


def _pick_tb(B):
    # Split the batch into >= 2 grid steps whenever B allows it (both v7x
    # TensorCores get work under "parallel"), and cap the tile so the
    # double-buffered I/O + activations stay comfortably inside VMEM.
    half = _r8((B + 1) // 2)
    return max(8, min(MAX_TB, half))


def _invoke(x_pad, packed, tb, out_dtype, weight_mode):
    b_pad = x_pad.shape[0]

    def const_spec(arr):
        kwargs = {} if weight_mode is None else dict(pipeline_mode=weight_mode)
        return pl.BlockSpec(arr.shape, lambda i: (0, 0), **kwargs)

    in_specs = [pl.BlockSpec((tb, NUM_INPUTS), lambda i: (i, 0))]
    in_specs += [const_spec(a) for a in packed]

    # Resident weights (< ~2 MiB) + ~40 KiB/sample generous activation budget.
    vmem_limit = int(min(48 * 1024 * 1024, (8 << 20) + tb * 40 * 1024))

    return pl.pallas_call(
        cnn_kernel,
        out_shape=jax.ShapeDtypeStruct((b_pad, CLASSES_PAD), out_dtype),
        grid_spec=pltpu.PrefetchScalarGridSpec(
            num_scalar_prefetch=0,
            grid=(b_pad // tb,),
            in_specs=in_specs,
            out_specs=pl.BlockSpec((tb, CLASSES_PAD), lambda i: (i, 0)),
        ),
        compiler_params=pltpu.CompilerParams(
            dimension_semantics=("parallel",),
            vmem_limit_bytes=vmem_limit,
        ),
    )(x_pad, *packed)


def cnn_forward_pallas(x, packed, tb=None, out_dtype=jnp.float32):
    """x: (B, 39) float32 (raw rows).  packed: output of prepare_params."""
    B = x.shape[0]
    tb = _pick_tb(B) if tb is None else tb
    b_pad = pl.cdiv(B, tb) * tb
    x_pad = jnp.pad(x, ((0, b_pad - B), (0, 0))) if b_pad != B else x

    try:
        out = _invoke(x_pad, packed, tb, out_dtype, _WEIGHT_PIPELINE[0])
    except Exception:
        if _WEIGHT_PIPELINE[0] is None:
            raise
        # pipeline_mode=Buffered(1) unsupported on this jax build -> default buffering.
        _WEIGHT_PIPELINE[0] = None
        out = _invoke(x_pad, packed, tb, out_dtype, None)

    return out[:B, :NUM_CLASSES]


# --------------------------- pure-JAX reference ---------------------------- #

def cnn_forward_reference(x, params):
    w1, b1, w2, b2, w3, b3, wf1, bf1, wf2, bf2 = params
    dn = ("NCH", "OIH", "NCH")

    def conv(h, w, b):
        o = lax.conv_general_dilated(h, w, (1,), "VALID", dimension_numbers=dn)
        return jax.nn.relu(o + b[None, :, None])

    def pool(h):
        return lax.reduce_window(h, -jnp.inf, lax.max, (1, 1, 2), (1, 1, 2), "VALID")

    h = x.reshape(-1, NUM_CHANNELS, FEAT_LEN)
    h = conv(h, w1, b1)
    h = conv(h, w2, b2)
    h = pool(h)
    h = conv(h, w3, b3)
    h = pool(h)
    h = h.reshape(-1, 96)
    h = jax.nn.relu(h @ wf1.T + bf1)
    logits = h @ wf2.T + bf2
    return jax.nn.log_softmax(logits, axis=1)


# ---------------------------------- main ----------------------------------- #

def make_params(key):
    ks = jax.random.split(key, 10)
    s = 0.05
    w1 = jax.random.normal(ks[0], (24, NUM_CHANNELS, 4), jnp.float32) * s
    b1 = jax.random.normal(ks[1], (24,), jnp.float32) * s
    w2 = jax.random.normal(ks[2], (48, 24, 3), jnp.float32) * s
    b2 = jax.random.normal(ks[3], (48,), jnp.float32) * s
    w3 = jax.random.normal(ks[4], (96, 48, 3), jnp.float32) * s
    b3 = jax.random.normal(ks[5], (96,), jnp.float32) * s
    wf1 = jax.random.normal(ks[6], (256, 96), jnp.float32) * s
    bf1 = jax.random.normal(ks[7], (256,), jnp.float32) * s
    wf2 = jax.random.normal(ks[8], (38, 256), jnp.float32) * s
    bf2 = jax.random.normal(ks[9], (38,), jnp.float32) * s
    return (w1, b1, w2, b2, w3, b3, wf1, bf1, wf2, bf2)


if __name__ == "__main__":
    key = jax.random.PRNGKey(0)
    k_x, k_p, k_x2 = jax.random.split(key, 3)

    params = make_params(k_p)

    # Small batch, f32 MXU operands (exact path / v5e default).
    B = 8
    x = jax.random.normal(k_x, (B, NUM_INPUTS), jnp.float32)
    ref = jax.block_until_ready(cnn_forward_reference(x, params))

    packed_f32 = prepare_params(params, jnp.float32)
    out = jax.block_until_ready(cnn_forward_pallas(x, packed_f32))
    assert out.shape == (B, NUM_CLASSES), out.shape
    np.testing.assert_allclose(np.asarray(out), np.asarray(ref), rtol=1e-4, atol=1e-4)

    # bf16 MXU operands, f32 accumulation/elementwise (v6e/v7x fast path).
    packed_bf16 = prepare_params(params, jnp.bfloat16)
    out_bf16 = jax.block_until_ready(cnn_forward_pallas(x, packed_bf16))
    np.testing.assert_allclose(np.asarray(out_bf16), np.asarray(ref),
                               rtol=0, atol=2e-2)

    # Multi-tile grid (2 batch tiles + padded rows), f32 path.
    B2 = 200
    x2 = jax.random.normal(k_x2, (B2, NUM_INPUTS), jnp.float32)
    ref2 = jax.block_until_ready(cnn_forward_reference(x2, params))
    out2 = jax.block_until_ready(cnn_forward_pallas(x2, packed_f32))
    np.testing.assert_allclose(np.asarray(out2), np.asarray(ref2),
                               rtol=1e-4, atol=1e-4)

    print("KERNEL_OK")
</pallas_src>

<mosaic_0001>
module attributes {stable_mosaic.version = 11 : i64} {
  func.func @cnn_kernel(%arg0: i32, %arg1: memref<8x39xf32, #tpu.memory_space<vmem>>, %arg2: memref<39x256xf32, #tpu.memory_space<vmem>>, %arg3: memref<256x512xf32, #tpu.memory_space<vmem>>, %arg4: memref<256x256xf32, #tpu.memory_space<vmem>>, %arg5: memref<128x256xf32, #tpu.memory_space<vmem>>, %arg6: memref<256x128xf32, #tpu.memory_space<vmem>>, %arg7: memref<1x256xf32, #tpu.memory_space<vmem>>, %arg8: memref<1x512xf32, #tpu.memory_space<vmem>>, %arg9: memref<1x256xf32, #tpu.memory_space<vmem>>, %arg10: memref<1x256xf32, #tpu.memory_space<vmem>>, %arg11: memref<1x128xf32, #tpu.memory_space<vmem>>, %arg12: memref<8x128xf32, #tpu.memory_space<vmem>>) attributes {dimension_semantics = [#tpu.dimension_semantics<parallel>], iteration_bounds = array<i64: 1>, scalar_prefetch = 0 : i64, scratch_operands = 0 : i64, tpu.core_type = #tpu.core_type<tc>, window_params = [{transform_indices = @transform_0, window_bounds = array<i64: 8, 39>}, {pipeline_mode = #tpu.pipeline_mode<synchronous>, transform_indices = @transform_1, window_bounds = array<i64: 39, 256>}, {pipeline_mode = #tpu.pipeline_mode<synchronous>, transform_indices = @transform_2, window_bounds = array<i64: 256, 512>}, {pipeline_mode = #tpu.pipeline_mode<synchronous>, transform_indices = @transform_3, window_bounds = array<i64: 256, 256>}, {pipeline_mode = #tpu.pipeline_mode<synchronous>, transform_indices = @transform_4, window_bounds = array<i64: 128, 256>}, {pipeline_mode = #tpu.pipeline_mode<synchronous>, transform_indices = @transform_5, window_bounds = array<i64: 256, 128>}, {pipeline_mode = #tpu.pipeline_mode<synchronous>, transform_indices = @transform_6, window_bounds = array<i64: 1, 256>}, {pipeline_mode = #tpu.pipeline_mode<synchronous>, transform_indices = @transform_7, window_bounds = array<i64: 1, 512>}, {pipeline_mode = #tpu.pipeline_mode<synchronous>, transform_indices = @transform_8, window_bounds = array<i64: 1, 256>}, {pipeline_mode = #tpu.pipeline_mode<synchronous>, transform_indices = @transform_9, window_bounds = array<i64: 1, 256>}, {pipeline_mode = #tpu.pipeline_mode<synchronous>, transform_indices = @transform_10, window_bounds = array<i64: 1, 128>}, {transform_indices = @transform_11, window_bounds = array<i64: 8, 128>}]} {
    %c0 = arith.constant 0 : index
    %c0_0 = arith.constant 0 : index
    %0 = vector.load %arg1[%c0, %c0_0] : memref<8x39xf32, #tpu.memory_space<vmem>>, vector<8x39xf32>
    %c0_1 = arith.constant 0 : index
    %c0_2 = arith.constant 0 : index
    %1 = vector.load %arg2[%c0_1, %c0_2] : memref<39x256xf32, #tpu.memory_space<vmem>>, vector<39x256xf32>
    %cst = arith.constant dense<0.000000e+00> : vector<8x256xf32>
    %2 = tpu.matmul %0, %1, %cst {dimension_numbers = #tpu.dot_dimension_numbers<[1], [0], [0], [1], [0, 0, 1, 1], [], []>} : vector<8x39xf32>, vector<39x256xf32>, vector<8x256xf32> -> vector<8x256xf32>
    %c0_3 = arith.constant 0 : index
    %c0_4 = arith.constant 0 : index
    %3 = vector.load %arg7[%c0_3, %c0_4] : memref<1x256xf32, #tpu.memory_space<vmem>>, vector<1x256xf32>
    %4 = vector.broadcast %3 : vector<1x256xf32> to vector<8x256xf32>
    %5 = arith.addf %2, %4 : vector<8x256xf32>
    %cst_5 = arith.constant 0.000000e+00 : f32
    %6 = vector.broadcast %cst_5 : f32 to vector<8x256xf32>
    %7 = arith.maximumf %5, %6 : vector<8x256xf32>
    %c0_6 = arith.constant 0 : index
    %c0_7 = arith.constant 0 : index
    %8 = vector.load %arg3[%c0_6, %c0_7] : memref<256x512xf32, #tpu.memory_space<vmem>>, vector<256x512xf32>
    %cst_8 = arith.constant dense<0.000000e+00> : vector<8x512xf32>
    %9 = tpu.matmul %7, %8, %cst_8 {dimension_numbers = #tpu.dot_dimension_numbers<[1], [0], [0], [1], [0, 0, 1, 1], [], []>} : vector<8x256xf32>, vector<256x512xf32>, vector<8x512xf32> -> vector<8x512xf32>
    %c0_9 = arith.constant 0 : index
    %c0_10 = arith.constant 0 : index
    %10 = vector.load %arg8[%c0_9, %c0_10] : memref<1x512xf32, #tpu.memory_space<vmem>>, vector<1x512xf32>
    %11 = vector.broadcast %10 : vector<1x512xf32> to vector<8x512xf32>
    %12 = arith.addf %9, %11 : vector<8x512xf32>
    %cst_11 = arith.constant 0.000000e+00 : f32
    %13 = vector.broadcast %cst_11 : f32 to vector<8x512xf32>
    %14 = arith.maximumf %12, %13 : vector<8x512xf32>
    %15 = vector.extract_strided_slice %14 {offsets = [0, 0], sizes = [8, 256], strides = [1, 1]} : vector<8x512xf32> to vector<8x256xf32>
    %16 = vector.extract_strided_slice %14 {offsets = [0, 256], sizes = [8, 256], strides = [1, 1]} : vector<8x512xf32> to vector<8x256xf32>
    %17 = arith.maximumf %15, %16 : vector<8x256xf32>
    %c0_12 = arith.constant 0 : index
    %c0_13 = arith.constant 0 : index
    %18 = vector.load %arg4[%c0_12, %c0_13] : memref<256x256xf32, #tpu.memory_space<vmem>>, vector<256x256xf32>
    %cst_14 = arith.constant dense<0.000000e+00> : vector<8x256xf32>
    %19 = tpu.matmul %17, %18, %cst_14 {dimension_numbers = #tpu.dot_dimension_numbers<[1], [0], [0], [1], [0, 0, 1, 1], [], []>} : vector<8x256xf32>, vector<256x256xf32>, vector<8x256xf32> -> vector<8x256xf32>
    %c0_15 = arith.constant 0 : index
    %c0_16 = arith.constant 0 : index
    %20 = vector.load %arg9[%c0_15, %c0_16] : memref<1x256xf32, #tpu.memory_space<vmem>>, vector<1x256xf32>
    %21 = vector.broadcast %20 : vector<1x256xf32> to vector<8x256xf32>
    %22 = arith.addf %19, %21 : vector<8x256xf32>
    %cst_17 = arith.constant 0.000000e+00 : f32
    %23 = vector.broadcast %cst_17 : f32 to vector<8x256xf32>
    %24 = arith.maximumf %22, %23 : vector<8x256xf32>
    %25 = vector.extract_strided_slice %24 {offsets = [0, 0], sizes = [8, 128], strides = [1, 1]} : vector<8x256xf32> to vector<8x128xf32>
    %26 = vector.extract_strided_slice %24 {offsets = [0, 128], sizes = [8, 128], strides = [1, 1]} : vector<8x256xf32> to vector<8x128xf32>
    %27 = arith.maximumf %25, %26 : vector<8x128xf32>
    %c0_18 = arith.constant 0 : index
    %c0_19 = arith.constant 0 : index
    %28 = vector.load %arg5[%c0_18, %c0_19] : memref<128x256xf32, #tpu.memory_space<vmem>>, vector<128x256xf32>
    %cst_20 = arith.constant dense<0.000000e+00> : vector<8x256xf32>
    %29 = tpu.matmul %27, %28, %cst_20 {dimension_numbers = #tpu.dot_dimension_numbers<[1], [0], [0], [1], [0, 0, 1, 1], [], []>} : vector<8x128xf32>, vector<128x256xf32>, vector<8x256xf32> -> vector<8x256xf32>
    %c0_21 = arith.constant 0 : index
    %c0_22 = arith.constant 0 : index
    %30 = vector.load %arg10[%c0_21, %c0_22] : memref<1x256xf32, #tpu.memory_space<vmem>>, vector<1x256xf32>
    %31 = vector.broadcast %30 : vector<1x256xf32> to vector<8x256xf32>
    %32 = arith.addf %29, %31 : vector<8x256xf32>
    %cst_23 = arith.constant 0.000000e+00 : f32
    %33 = vector.broadcast %cst_23 : f32 to vector<8x256xf32>
    %34 = arith.maximumf %32, %33 : vector<8x256xf32>
    %c0_24 = arith.constant 0 : index
    %c0_25 = arith.constant 0 : index
    %35 = vector.load %arg6[%c0_24, %c0_25] : memref<256x128xf32, #tpu.memory_space<vmem>>, vector<256x128xf32>
    %cst_26 = arith.constant dense<0.000000e+00> : vector<8x128xf32>
    %36 = tpu.matmul %34, %35, %cst_26 {dimension_numbers = #tpu.dot_dimension_numbers<[1], [0], [0], [1], [0, 0, 1, 1], [], []>} : vector<8x256xf32>, vector<256x128xf32>, vector<8x128xf32> -> vector<8x128xf32>
    %c0_27 = arith.constant 0 : index
    %c0_28 = arith.constant 0 : index
    %37 = vector.load %arg11[%c0_27, %c0_28] : memref<1x128xf32, #tpu.memory_space<vmem>>, vector<1x128xf32>
    %38 = vector.broadcast %37 : vector<1x128xf32> to vector<8x128xf32>
    %39 = arith.addf %36, %38 : vector<8x128xf32>
    %cst_29 = arith.constant dense<0xFF800000> : vector<8xf32>
    %40 = vector.multi_reduction <maximumf>, %39, %cst_29 [1] : vector<8x128xf32> to vector<8xf32>
    %41 = vector.shape_cast %40 : vector<8xf32> to vector<8x1xf32>
    %42 = vector.broadcast %41 : vector<8x1xf32> to vector<8x128xf32>
    %43 = arith.subf %39, %42 : vector<8x128xf32>
    %44 = math.exp %43 : vector<8x128xf32>
    %cst_30 = arith.constant dense<0.000000e+00> : vector<8xf32>
    %45 = vector.multi_reduction <add>, %44, %cst_30 [1] : vector<8x128xf32> to vector<8xf32>
    %46 = vector.shape_cast %45 : vector<8xf32> to vector<8x1xf32>
    %47 = math.log %46 : vector<8x1xf32>
    %48 = vector.broadcast %47 : vector<8x1xf32> to vector<8x128xf32>
    %49 = arith.subf %43, %48 : vector<8x128xf32>
    %c0_31 = arith.constant 0 : index
    %c0_32 = arith.constant 0 : index
    %50 = vector.load %arg12[%c0_31, %c0_32] : memref<8x128xf32, #tpu.memory_space<vmem>>, vector<8x128xf32>
    tpu.vector_store %arg12[%c0_31, %c0_32], %49 {strides = array<i32>} : memref<8x128xf32, #tpu.memory_space<vmem>>, vector<8x128xf32>,
    return
  }
  func.func @transform_0(%arg0: i32) -> (i32, i32) {
    %c0_i32 = arith.constant 0 : i32
    %c0_i32_0 = arith.constant 0 : i32
    return %arg0, %c0_i32 : i32, i32
  }
  func.func @transform_1(%arg0: i32) -> (i32, i32) {
    %c0_i32 = arith.constant 0 : i32
    %c0_i32_0 = arith.constant 0 : i32
    %c0_i32_1 = arith.constant 0 : i32
    return %c0_i32, %c0_i32_0 : i32, i32
  }
  func.func @transform_2(%arg0: i32) -> (i32, i32) {
    %c0_i32 = arith.constant 0 : i32
    %c0_i32_0 = arith.constant 0 : i32
    %c0_i32_1 = arith.constant 0 : i32
    return %c0_i32, %c0_i32_0 : i32, i32
  }
  func.func @transform_3(%arg0: i32) -> (i32, i32) {
    %c0_i32 = arith.constant 0 : i32
    %c0_i32_0 = arith.constant 0 : i32
    %c0_i32_1 = arith.constant 0 : i32
    return %c0_i32, %c0_i32_0 : i32, i32
  }
  func.func @transform_4(%arg0: i32) -> (i32, i32) {
    %c0_i32 = arith.constant 0 : i32
    %c0_i32_0 = arith.constant 0 : i32
    %c0_i32_1 = arith.constant 0 : i32
    return %c0_i32, %c0_i32_0 : i32, i32
  }
  func.func @transform_5(%arg0: i32) -> (i32, i32) {
    %c0_i32 = arith.constant 0 : i32
    %c0_i32_0 = arith.constant 0 : i32
    %c0_i32_1 = arith.constant 0 : i32
    return %c0_i32, %c0_i32_0 : i32, i32
  }
  func.func @transform_6(%arg0: i32) -> (i32, i32) {
    %c0_i32 = arith.constant 0 : i32
    %c0_i32_0 = arith.constant 0 : i32
    %c0_i32_1 = arith.constant 0 : i32
    return %c0_i32, %c0_i32_0 : i32, i32
  }
  func.func @transform_7(%arg0: i32) -> (i32, i32) {
    %c0_i32 = arith.constant 0 : i32
    %c0_i32_0 = arith.constant 0 : i32
    %c0_i32_1 = arith.constant 0 : i32
    return %c0_i32, %c0_i32_0 : i32, i32
  }
  func.func @transform_8(%arg0: i32) -> (i32, i32) {
    %c0_i32 = arith.constant 0 : i32
    %c0_i32_0 = arith.constant 0 : i32
    %c0_i32_1 = arith.constant 0 : i32
    return %c0_i32, %c0_i32_0 : i32, i32
  }
  func.func @transform_9(%arg0: i32) -> (i32, i32) {
    %c0_i32 = arith.constant 0 : i32
    %c0_i32_0 = arith.constant 0 : i32
    %c0_i32_1 = arith.constant 0 : i32
    return %c0_i32, %c0_i32_0 : i32, i32
  }
  func.func @transform_10(%arg0: i32) -> (i32, i32) {
    %c0_i32 = arith.constant 0 : i32
    %c0_i32_0 = arith.constant 0 : i32
    %c0_i32_1 = arith.constant 0 : i32
    return %c0_i32, %c0_i32_0 : i32, i32
  }
  func.func @transform_11(%arg0: i32) -> (i32, i32) {
    %c0_i32 = arith.constant 0 : i32
    %c0_i32_0 = arith.constant 0 : i32
    return %arg0, %c0_i32 : i32, i32
  }
}

module attributes {stable_mosaic.version = 11 : i64} {
  func.func @cnn_kernel(%arg0: i32, %arg1: memref<8x39xf32, #tpu.memory_space<vmem>>, %arg2: memref<39x256xf32, #tpu.memory_space<vmem>>, %arg3: memref<256x512xf32, #tpu.memory_space<vmem>>, %arg4: memref<256x256xf32, #tpu.memory_space<vmem>>, %arg5: memref<128x256xf32, #tpu.memory_space<vmem>>, %arg6: memref<256x128xf32, #tpu.memory_space<vmem>>, %arg7: memref<1x256xf32, #tpu.memory_space<vmem>>, %arg8: memref<1x512xf32, #tpu.memory_space<vmem>>, %arg9: memref<1x256xf32, #tpu.memory_space<vmem>>, %arg10: memref<1x256xf32, #tpu.memory_space<vmem>>, %arg11: memref<1x128xf32, #tpu.memory_space<vmem>>, %arg12: memref<8x128xf32, #tpu.memory_space<vmem>>) attributes {dimension_semantics = [#tpu.dimension_semantics<parallel>], iteration_bounds = array<i64: 1>, scalar_prefetch = 0 : i64, scratch_operands = 0 : i64, tpu.core_type = #tpu.core_type<tc>, window_params = [{transform_indices = @transform_0, window_bounds = array<i64: 8, 39>}, {pipeline_mode = #tpu.pipeline_mode<synchronous>, transform_indices = @transform_1, window_bounds = array<i64: 39, 256>}, {pipeline_mode = #tpu.pipeline_mode<synchronous>, transform_indices = @transform_2, window_bounds = array<i64: 256, 512>}, {pipeline_mode = #tpu.pipeline_mode<synchronous>, transform_indices = @transform_3, window_bounds = array<i64: 256, 256>}, {pipeline_mode = #tpu.pipeline_mode<synchronous>, transform_indices = @transform_4, window_bounds = array<i64: 128, 256>}, {pipeline_mode = #tpu.pipeline_mode<synchronous>, transform_indices = @transform_5, window_bounds = array<i64: 256, 128>}, {pipeline_mode = #tpu.pipeline_mode<synchronous>, transform_indices = @transform_6, window_bounds = array<i64: 1, 256>}, {pipeline_mode = #tpu.pipeline_mode<synchronous>, transform_indices = @transform_7, window_bounds = array<i64: 1, 512>}, {pipeline_mode = #tpu.pipeline_mode<synchronous>, transform_indices = @transform_8, window_bounds = array<i64: 1, 256>}, {pipeline_mode = #tpu.pipeline_mode<synchronous>, transform_indices = @transform_9, window_bounds = array<i64: 1, 256>}, {pipeline_mode = #tpu.pipeline_mode<synchronous>, transform_indices = @transform_10, window_bounds = array<i64: 1, 128>}, {transform_indices = @transform_11, window_bounds = array<i64: 8, 128>}]} {
    %c0 = arith.constant 0 : index
    %c0_0 = arith.constant 0 : index
    %0 = vector.load %arg1[%c0, %c0_0] : memref<8x39xf32, #tpu.memory_space<vmem>>, vector<8x39xf32>
    %c0_1 = arith.constant 0 : index
    %c0_2 = arith.constant 0 : index
    %1 = vector.load %arg2[%c0_1, %c0_2] : memref<39x256xf32, #tpu.memory_space<vmem>>, vector<39x256xf32>
    %cst = arith.constant dense<0.000000e+00> : vector<8x256xf32>
    %2 = tpu.matmul %0, %1, %cst {dimension_numbers = #tpu.dot_dimension_numbers<[1], [0], [0], [1], [0, 0, 1, 1], [], []>} : vector<8x39xf32>, vector<39x256xf32>, vector<8x256xf32> -> vector<8x256xf32>
    %c0_3 = arith.constant 0 : index
    %c0_4 = arith.constant 0 : index
    %3 = vector.load %arg7[%c0_3, %c0_4] : memref<1x256xf32, #tpu.memory_space<vmem>>, vector<1x256xf32>
    %4 = vector.broadcast %3 : vector<1x256xf32> to vector<8x256xf32>
    %5 = arith.addf %2, %4 : vector<8x256xf32>
    %cst_5 = arith.constant 0.000000e+00 : f32
    %6 = vector.broadcast %cst_5 : f32 to vector<8x256xf32>
    %7 = arith.maximumf %5, %6 : vector<8x256xf32>
    %c0_6 = arith.constant 0 : index
    %c0_7 = arith.constant 0 : index
    %8 = vector.load %arg3[%c0_6, %c0_7] : memref<256x512xf32, #tpu.memory_space<vmem>>, vector<256x512xf32>
    %cst_8 = arith.constant dense<0.000000e+00> : vector<8x512xf32>
    %9 = tpu.matmul %7, %8, %cst_8 {dimension_numbers = #tpu.dot_dimension_numbers<[1], [0], [0], [1], [0, 0, 1, 1], [], []>} : vector<8x256xf32>, vector<256x512xf32>, vector<8x512xf32> -> vector<8x512xf32>
    %c0_9 = arith.constant 0 : index
    %c0_10 = arith.constant 0 : index
    %10 = vector.load %arg8[%c0_9, %c0_10] : memref<1x512xf32, #tpu.memory_space<vmem>>, vector<1x512xf32>
    %11 = vector.broadcast %10 : vector<1x512xf32> to vector<8x512xf32>
    %12 = arith.addf %9, %11 : vector<8x512xf32>
    %cst_11 = arith.constant 0.000000e+00 : f32
    %13 = vector.broadcast %cst_11 : f32 to vector<8x512xf32>
    %14 = arith.maximumf %12, %13 : vector<8x512xf32>
    %15 = vector.extract_strided_slice %14 {offsets = [0, 0], sizes = [8, 256], strides = [1, 1]} : vector<8x512xf32> to vector<8x256xf32>
    %16 = vector.extract_strided_slice %14 {offsets = [0, 256], sizes = [8, 256], strides = [1, 1]} : vector<8x512xf32> to vector<8x256xf32>
    %17 = arith.maximumf %15, %16 : vector<8x256xf32>
    %c0_12 = arith.constant 0 : index
    %c0_13 = arith.constant 0 : index
    %18 = vector.load %arg4[%c0_12, %c0_13] : memref<256x256xf32, #tpu.memory_space<vmem>>, vector<256x256xf32>
    %cst_14 = arith.constant dense<0.000000e+00> : vector<8x256xf32>
    %19 = tpu.matmul %17, %18, %cst_14 {dimension_numbers = #tpu.dot_dimension_numbers<[1], [0], [0], [1], [0, 0, 1, 1], [], []>} : vector<8x256xf32>, vector<256x256xf32>, vector<8x256xf32> -> vector<8x256xf32>
    %c0_15 = arith.constant 0 : index
    %c0_16 = arith.constant 0 : index
    %20 = vector.load %arg9[%c0_15, %c0_16] : memref<1x256xf32, #tpu.memory_space<vmem>>, vector<1x256xf32>
    %21 = vector.broadcast %20 : vector<1x256xf32> to vector<8x256xf32>
    %22 = arith.addf %19, %21 : vector<8x256xf32>
    %cst_17 = arith.constant 0.000000e+00 : f32
    %23 = vector.broadcast %cst_17 : f32 to vector<8x256xf32>
    %24 = arith.maximumf %22, %23 : vector<8x256xf32>
    %25 = vector.extract_strided_slice %24 {offsets = [0, 0], sizes = [8, 128], strides = [1, 1]} : vector<8x256xf32> to vector<8x128xf32>
    %26 = vector.extract_strided_slice %24 {offsets = [0, 128], sizes = [8, 128], strides = [1, 1]} : vector<8x256xf32> to vector<8x128xf32>
    %27 = arith.maximumf %25, %26 : vector<8x128xf32>
    %c0_18 = arith.constant 0 : index
    %c0_19 = arith.constant 0 : index
    %28 = vector.load %arg5[%c0_18, %c0_19] : memref<128x256xf32, #tpu.memory_space<vmem>>, vector<128x256xf32>
    %cst_20 = arith.constant dense<0.000000e+00> : vector<8x256xf32>
    %29 = tpu.matmul %27, %28, %cst_20 {dimension_numbers = #tpu.dot_dimension_numbers<[1], [0], [0], [1], [0, 0, 1, 1], [], []>} : vector<8x128xf32>, vector<128x256xf32>, vector<8x256xf32> -> vector<8x256xf32>
    %c0_21 = arith.constant 0 : index
    %c0_22 = arith.constant 0 : index
    %30 = vector.load %arg10[%c0_21, %c0_22] : memref<1x256xf32, #tpu.memory_space<vmem>>, vector<1x256xf32>
    %31 = vector.broadcast %30 : vector<1x256xf32> to vector<8x256xf32>
    %32 = arith.addf %29, %31 : vector<8x256xf32>
    %cst_23 = arith.constant 0.000000e+00 : f32
    %33 = vector.broadcast %cst_23 : f32 to vector<8x256xf32>
    %34 = arith.maximumf %32, %33 : vector<8x256xf32>
    %c0_24 = arith.constant 0 : index
    %c0_25 = arith.constant 0 : index
    %35 = vector.load %arg6[%c0_24, %c0_25] : memref<256x128xf32, #tpu.memory_space<vmem>>, vector<256x128xf32>
    %cst_26 = arith.constant dense<0.000000e+00> : vector<8x128xf32>
    %36 = tpu.matmul %34, %35, %cst_26 {dimension_numbers = #tpu.dot_dimension_numbers<[1], [0], [0], [1], [0, 0, 1, 1], [], []>} : vector<8x256xf32>, vector<256x128xf32>, vector<8x128xf32> -> vector<8x128xf32>
    %c0_27 = arith.constant 0 : index
    %c0_28 = arith.constant 0 : index
    %37 = vector.load %arg11[%c0_27, %c0_28] : memref<1x128xf32, #tpu.memory_space<vmem>>, vector<1x128xf32>
    %38 = vector.broadcast %37 : vector<1x128xf32> to vector<8x128xf32>
    %39 = arith.addf %36, %38 : vector<8x128xf32>
    %cst_29 = arith.constant dense<0xFF800000> : vector<8xf32>
    %40 = vector.multi_reduction <maximumf>, %39, %cst_29 [1] : vector<8x128xf32> to vector<8xf32>
    %41 = vector.shape_cast %40 : vector<8xf32> to vector<8x1xf32>
    %42 = vector.broadcast %41 : vector<8x1xf32> to vector<8x128xf32>
    %43 = arith.subf %39, %42 : vector<8x128xf32>
    %44 = math.exp %43 : vector<8x128xf32>
    %cst_30 = arith.constant dense<0.000000e+00> : vector<8xf32>
    %45 = vector.multi_reduction <add>, %44, %cst_30 [1] : vector<8x128xf32> to vector<8xf32>
    %46 = vector.shape_cast %45 : vector<8xf32> to vector<8x1xf32>
    %47 = math.log %46 : vector<8x1xf32>
    %48 = vector.broadcast %47 : vector<8x1xf32> to vector<8x128xf32>
    %49 = arith.subf %43, %48 : vector<8x128xf32>
    %c0_31 = arith.constant 0 : index
    %c0_32 = arith.constant 0 : index
    %50 = vector.load %arg12[%c0_31, %c0_32] : memref<8x128xf32, #tpu.memory_space<vmem>>, vector<8x128xf32>
    tpu.vector_store %arg12[%c0_31, %c0_32], %49 {strides = array<i32>} : memref<8x128xf32, #tpu.memory_space<vmem>>, vector<8x128xf32>,
    return
  }
  func.func @transform_0(%arg0: i32) -> (i32, i32) {
    %c0_i32 = arith.constant 0 : i32
    %c0_i32_0 = arith.constant 0 : i32
    return %arg0, %c0_i32 : i32, i32
  }
  func.func @transform_1(%arg0: i32) -> (i32, i32) {
    %c0_i32 = arith.constant 0 : i32
    %c0_i32_0 = arith.constant 0 : i32
    %c0_i32_1 = arith.constant 0 : i32
    return %c0_i32, %c0_i32_0 : i32, i32
  }
  func.func @transform_2(%arg0: i32) -> (i32, i32) {
    %c0_i32 = arith.constant 0 : i32
    %c0_i32_0 = arith.constant 0 : i32
    %c0_i32_1 = arith.constant 0 : i32
    return %c0_i32, %c0_i32_0 : i32, i32
  }
  func.func @transform_3(%arg0: i32) -> (i32, i32) {
    %c0_i32 = arith.constant 0 : i32
    %c0_i32_0 = arith.constant 0 : i32
    %c0_i32_1 = arith.constant 0 : i32
    return %c0_i32, %c0_i32_0 : i32, i32
  }
  func.func @transform_4(%arg0: i32) -> (i32, i32) {
    %c0_i32 = arith.constant 0 : i32
    %c0_i32_0 = arith.constant 0 : i32
    %c0_i32_1 = arith.constant 0 : i32
    return %c0_i32, %c0_i32_0 : i32, i32
  }
  func.func @transform_5(%arg0: i32) -> (i32, i32) {
    %c0_i32 = arith.constant 0 : i32
    %c0_i32_0 = arith.constant 0 : i32
    %c0_i32_1 = arith.constant 0 : i32
    return %c0_i32, %c0_i32_0 : i32, i32
  }
  func.func @transform_6(%arg0: i32) -> (i32, i32) {
    %c0_i32 = arith.constant 0 : i32
    %c0_i32_0 = arith.constant 0 : i32
    %c0_i32_1 = arith.constant 0 : i32
    return %c0_i32, %c0_i32_0 : i32, i32
  }
  func.func @transform_7(%arg0: i32) -> (i32, i32) {
    %c0_i32 = arith.constant 0 : i32
    %c0_i32_0 = arith.constant 0 : i32
    %c0_i32_1 = arith.constant 0 : i32
    return %c0_i32, %c0_i32_0 : i32, i32
  }
  func.func @transform_8(%arg0: i32) -> (i32, i32) {
    %c0_i32 = arith.constant 0 : i32
    %c0_i32_0 = arith.constant 0 : i32
    %c0_i32_1 = arith.constant 0 : i32
    return %c0_i32, %c0_i32_0 : i32, i32
  }
  func.func @transform_9(%arg0: i32) -> (i32, i32) {
    %c0_i32 = arith.constant 0 : i32
    %c0_i32_0 = arith.constant 0 : i32
    %c0_i32_1 = arith.constant 0 : i32
    return %c0_i32, %c0_i32_0 : i32, i32
  }
  func.func @transform_10(%arg0: i32) -> (i32, i32) {
    %c0_i32 = arith.constant 0 : i32
    %c0_i32_0 = arith.constant 0 : i32
    %c0_i32_1 = arith.constant 0 : i32
    return %c0_i32, %c0_i32_0 : i32, i32
  }
  func.func @transform_11(%arg0: i32) -> (i32, i32) {
    %c0_i32 = arith.constant 0 : i32
    %c0_i32_0 = arith.constant 0 : i32
    return %arg0, %c0_i32 : i32, i32
  }
}

</mosaic_0001>

<llo_original>
// kernel: tpu_custom_call.1
$region0: #{tpu_custom_call.1}
  #allocation0 [shape = 'u32[]', space=smem, size = 0x4, offset = 0x4, fixed_abs, tag = 'smem constant byte address 0x4 - core index']
  #allocation1 [shape = 'u32[144,128]{1,0:T(1,128)}', space=vmem, size = 0x12000, scoped, tag = 'internal scratch']
  %s0 = inlined_call_operand.hbm [shape: f32[8,39], index: 0, kind: input, shape index: {}]
  %s1 = inlined_call_operand.hbm [shape: f32[39,256], index: 1, kind: input, shape index: {}]
  %s2 = inlined_call_operand.hbm [shape: f32[256,512], index: 2, kind: input, shape index: {}]
  %s3 = inlined_call_operand.hbm [shape: f32[256,256], index: 3, kind: input, shape index: {}]
  %s4 = inlined_call_operand.hbm [shape: f32[128,256], index: 4, kind: input, shape index: {}]
  %s5 = inlined_call_operand.hbm [shape: f32[256,128], index: 5, kind: input, shape index: {}]
  %s6 = inlined_call_operand.vmem [shape: f32[1,256], index: 6, kind: input, shape index: {}]
  %s7 = inlined_call_operand.vmem [shape: f32[1,512], index: 7, kind: input, shape index: {}]
  %s8 = inlined_call_operand.vmem [shape: f32[1,256], index: 8, kind: input, shape index: {}]
  %s9 = inlined_call_operand.vmem [shape: f32[1,256], index: 9, kind: input, shape index: {}]
  %s10 = inlined_call_operand.vmem [shape: f32[1,128], index: 10, kind: input, shape index: {}]
  %s11 = inlined_call_operand.hbm [shape: f32[8,128], index: 11, kind: output, shape index: {}]
  %s12 = sld [smem:[#allocation0]]
  $region78: #{tpu_custom_call.1} parent=0
    _
  %s14 = ssub.s32 1, %s12
  %s15 = scalar_select 0, %s14, %s12
  $region1: #{tpu_custom_call.1} parent=0
    #allocation2 [shape = 'u8[4096]{0}', space=vmem, size = 0x1000, scoped, tag = 'input window, operand 0, single buffered']
    #allocation3 [shape = 's32[1]{0}', space=sflag, size = 0x4, scoped, tag = 'scoped memory for tpu_custom_call.1']
    #allocation4 [shape = 's32[1]{0}', space=sflag, size = 0x4, scoped, tag = 'scoped memory for tpu_custom_call.1']
    #allocation5 [shape = 'u8[40960]{0}', space=vmem, size = 0xa000, scoped, tag = 'input window, operand 1, single buffered']
    #allocation6 [shape = 's32[1]{0}', space=sflag, size = 0x4, scoped, tag = 'scoped memory for tpu_custom_call.1']
    #allocation7 [shape = 'u8[524288]{0}', space=vmem, size = 0x80000, scoped, tag = 'input window, operand 2, single buffered']
    #allocation8 [shape = 'u8[262144]{0}', space=vmem, size = 0x40000, scoped, tag = 'input window, operand 3, single buffered']
    #allocation9 [shape = 's32[1]{0}', space=sflag, size = 0x4, scoped, tag = 'scoped memory for tpu_custom_call.1']
    #allocation10 [shape = 'u8[131072]{0}', space=vmem, size = 0x20000, scoped, tag = 'input window, operand 4, single buffered']
    #allocation11 [shape = 'u8[131072]{0}', space=vmem, size = 0x20000, scoped, tag = 'input window, operand 5, single buffered']
    #allocation12 [shape = 's32[1]{0}', space=sflag, size = 0x4, scoped, tag = 'scoped memory for tpu_custom_call.1']
    #allocation13 [shape = 'u8[4096]{0}', space=vmem, size = 0x1000, scoped, tag = 'output window, operand 0, single buffered']
    %16 = vsyncpa [#allocation3], 0
    %17 = vsyncpa [#allocation6], 0
    %18 = vsyncpa [#allocation9], 0
    %19 = vsyncpa [#allocation12], 0
    %20 = vsyncpa [#allocation4], 0
    // Predicated region
    $region2: #{tpu_custom_call.1} parent=1 // pred_check
      _
    $region3: #{tpu_custom_call.1} parent=1 // pred_check_branch
      %22 = sbr.rel (0) target = $region5
    $region4: #{tpu_custom_call.1} parent=1 // pred_region
      %s24 = ssub.s32 128, 128
      %25 = vsyncadd [#allocation3], %s24
      %s27 = sshll.u32 [#allocation2], 4
      %s28 = int_to_ptr.vmem [resolvable:$true] %s27
      %30 = dma.hbm_to_vmem [thread:$0]  %s0, 128, %s28, [#allocation3]
    $region5: #{tpu_custom_call.1} parent=1 // pred_fallthru
      _
    // Predicated region
    $region6: #{tpu_custom_call.1} parent=1 // pred_check
      _
    $region7: #{tpu_custom_call.1} parent=1 // pred_check_branch
      %32 = sbr.rel (0) target = $region9
    $region8: #{tpu_custom_call.1} parent=1 // pred_region
      %s34 = ssub.s32 1280, 1280
      %35 = vsyncadd [#allocation6], %s34
      %s36 = sshll.u32 [#allocation5], 4
      %s37 = int_to_ptr.vmem [resolvable:$true] %s36
      %42 = dma.hbm_to_vmem [thread:$0]  %s1, 1280, %s37, [#allocation6], 256, 256, 16
    $region9: #{tpu_custom_call.1} parent=1 // pred_fallthru
      _
    // Predicated region
    $region10: #{tpu_custom_call.1} parent=1 // pred_check
      _
    $region11: #{tpu_custom_call.1} parent=1 // pred_check_branch
      %44 = sbr.rel (0) target = $region13
    $region12: #{tpu_custom_call.1} parent=1 // pred_region
      %s46 = ssub.s32 16384, 16384
      %47 = vsyncadd [#allocation6], %s46
      %s48 = sshll.u32 [#allocation7], 4
      %s49 = int_to_ptr.vmem [resolvable:$true] %s48
      %54 = dma.hbm_to_vmem [thread:$0]  %s2, 16384, %s49, [#allocation6], 512, 512, 32
    $region13: #{tpu_custom_call.1} parent=1 // pred_fallthru
      _
    // Predicated region
    $region14: #{tpu_custom_call.1} parent=1 // pred_check
      _
    $region15: #{tpu_custom_call.1} parent=1 // pred_check_branch
      %56 = sbr.rel (0) target = $region17
    $region16: #{tpu_custom_call.1} parent=1 // pred_region
      %s58 = ssub.s32 8192, 8192
      %59 = vsyncadd [#allocation9], %s58
      %s60 = sshll.u32 [#allocation8], 4
      %s61 = int_to_ptr.vmem [resolvable:$true] %s60
      %66 = dma.hbm_to_vmem [thread:$0]  %s3, 8192, %s61, [#allocation9], 256, 256, 16
    $region17: #{tpu_custom_call.1} parent=1 // pred_fallthru
      _
    // Predicated region
    $region18: #{tpu_custom_call.1} parent=1 // pred_check
      _
    $region19: #{tpu_custom_call.1} parent=1 // pred_check_branch
      %68 = sbr.rel (0) target = $region21
    $region20: #{tpu_custom_call.1} parent=1 // pred_region
      %s70 = ssub.s32 4096, 4096
      %71 = vsyncadd [#allocation9], %s70
      %s72 = sshll.u32 [#allocation10], 4
      %s73 = int_to_ptr.vmem [resolvable:$true] %s72
      %78 = dma.hbm_to_vmem [thread:$0]  %s4, 4096, %s73, [#allocation9], 256, 256, 16
    $region21: #{tpu_custom_call.1} parent=1 // pred_fallthru
      _
    // Predicated region
    $region22: #{tpu_custom_call.1} parent=1 // pred_check
      _
    $region23: #{tpu_custom_call.1} parent=1 // pred_check_branch
      %80 = sbr.rel (0) target = $region25
    $region24: #{tpu_custom_call.1} parent=1 // pred_region
      %s82 = ssub.s32 4096, 4096
      %83 = vsyncadd [#allocation12], %s82
      %s84 = sshll.u32 [#allocation11], 4
      %s85 = int_to_ptr.vmem [resolvable:$true] %s84
      %90 = dma.hbm_to_vmem [thread:$0]  %s5, 4096, %s85, [#allocation12], 128, 128, 8
    $region25: #{tpu_custom_call.1} parent=1 // pred_fallthru
      _
    // Predicated region
    $region26: #{tpu_custom_call.1} parent=1 // pred_check
      _
    $region27: #{tpu_custom_call.1} parent=1 // pred_check_branch
      %92 = sbr.rel (0) target = $region29
    $region28: #{tpu_custom_call.1} parent=1 // pred_region
      _
    $region29: #{tpu_custom_call.1} parent=1 // pred_fallthru
      _
    // Predicated region
    $region30: #{tpu_custom_call.1} parent=1 // pred_check
      _
    $region31: #{tpu_custom_call.1} parent=1 // pred_check_branch
      %94 = sbr.rel (0) target = $region33
    $region32: #{tpu_custom_call.1} parent=1 // pred_region
      _
    $region33: #{tpu_custom_call.1} parent=1 // pred_fallthru
      _
    // Predicated region
    $region34: #{tpu_custom_call.1} parent=1 // pred_check
      _
    $region35: #{tpu_custom_call.1} parent=1 // pred_check_branch
      %96 = sbr.rel (0) target = $region37
    $region36: #{tpu_custom_call.1} parent=1 // pred_region
      _
    $region37: #{tpu_custom_call.1} parent=1 // pred_fallthru
      _
    // Predicated region
    $region38: #{tpu_custom_call.1} parent=1 // pred_check
      _
    $region39: #{tpu_custom_call.1} parent=1 // pred_check_branch
      %98 = sbr.rel (0) target = $region41
    $region40: #{tpu_custom_call.1} parent=1 // pred_region
      _
    $region41: #{tpu_custom_call.1} parent=1 // pred_fallthru
      _
    // Predicated region
    $region42: #{tpu_custom_call.1} parent=1 // pred_check
      _
    $region43: #{tpu_custom_call.1} parent=1 // pred_check_branch
      %100 = sbr.rel (0) target = $region45
    $region44: #{tpu_custom_call.1} parent=1 // pred_region
      _
    $region45: #{tpu_custom_call.1} parent=1 // pred_fallthru
      _
    // Predicated region
    $region46: #{tpu_custom_call.1} parent=1 // pred_check
      _
    $region47: #{tpu_custom_call.1} parent=1 // pred_check_branch
      %102 = sbr.rel (0) target = $region49
    $region48: #{tpu_custom_call.1} parent=1 // pred_region
      %103 = dma.done [#allocation3], 128
    $region49: #{tpu_custom_call.1} parent=1 // pred_fallthru
      _
    // Predicated region
    $region50: #{tpu_custom_call.1} parent=1 // pred_check
      _
    $region51: #{tpu_custom_call.1} parent=1 // pred_check_branch
      %105 = sbr.rel (0) target = $region53
    $region52: #{tpu_custom_call.1} parent=1 // pred_region
      %106 = dma.done [#allocation6], 1280
    $region53: #{tpu_custom_call.1} parent=1 // pred_fallthru
      _
    // Predicated region
    $region54: #{tpu_custom_call.1} parent=1 // pred_check
      _
    $region55: #{tpu_custom_call.1} parent=1 // pred_check_branch
      %108 = sbr.rel (0) target = $region57
    $region56: #{tpu_custom_call.1} parent=1 // pred_region
      %109 = dma.done [#allocation6], 16384
    $region57: #{tpu_custom_call.1} parent=1 // pred_fallthru
      _
    // Predicated region
    $region58: #{tpu_custom_call.1} parent=1 // pred_check
      _
    $region59: #{tpu_custom_call.1} parent=1 // pred_check_branch
      %111 = sbr.rel (0) target = $region61
    $region60: #{tpu_custom_call.1} parent=1 // pred_region
      %112 = dma.done [#allocation9], 8192
    $region61: #{tpu_custom_call.1} parent=1 // pred_fallthru
      _
    // Predicated region
    $region62: #{tpu_custom_call.1} parent=1 // pred_check
      _
    $region63: #{tpu_custom_call.1} parent=1 // pred_check_branch
      %114 = sbr.rel (0) target = $region65
    $region64: #{tpu_custom_call.1} parent=1 // pred_region
      %115 = dma.done [#allocation9], 4096
    $region65: #{tpu_custom_call.1} parent=1 // pred_fallthru
      _
    // Predicated region
    $region66: #{tpu_custom_call.1} parent=1 // pred_check
      _
    $region67: #{tpu_custom_call.1} parent=1 // pred_check_branch
      %117 = sbr.rel (0) target = $region69
    $region68: #{tpu_custom_call.1} parent=1 // pred_region
      %118 = dma.done [#allocation12], 4096
    $region69: #{tpu_custom_call.1} parent=1 // pred_fallthru
      _
    %v119 = vld [vmem:[#allocation2] sm:$0xff]
    %v120 = vld [vmem:[#allocation5] sm:$0xff]
    %v121 = vld [vmem:[#allocation5 + $0x8] sm:$0xff]
    %v122 = vld [vmem:[#allocation5 + $0x10] sm:$0xff]
    %v123 = vld [vmem:[#allocation5 + $0x18] sm:$0xff]
    %v124 = vld [vmem:[#allocation5 + $0x20] sm:$0xff]
    %v125 = vld [vmem:[#allocation5 + $0x28] sm:$0xff]
    %v126 = vld [vmem:[#allocation5 + $0x30] sm:$0xff]
    %v127 = vld [vmem:[#allocation5 + $0x38] sm:$0xff]
    %v128 = vld [vmem:[#allocation5 + $0x40] sm:$0x7f]
    %v129 = vld [vmem:[#allocation5 + $0x48] sm:$0x7f]
    %v130 = vld [vmem:[%s6] sm:$0x3]
    %v132 = vlaneseq
    %v133 = vshrl.u32 %v132, 7
    %v134 = vsub.s32 0, %v133
    %v135 = vrot.slane %v130, %v134
    %v136 = vlaneseq
    %v137 = vshrl.u32 %v136, 7
    %v138 = vsub.s32 1, %v137
    %v139 = vrot.slane %v130, %v138
    %vm142 = vcmask 318464
    %v144 = vsel %vm142, %v119, 0
    %vm146 = vcmask 1046528
    %v148 = vsel %vm146, %v128, 0
    %v151 = vsel %vm146, %v129, 0
    %153 = vmatprep.subr.mxu0 %v121
    %154 = vmatpush1.msra.mxu0 %v120
    %155 = vmatprep.subr.mxu0 %v123
    %156 = vmatpush1.msra.mxu0 %v122
    %157 = vmatprep.subr.mxu0 %v125
    %158 = vmatpush1.msra.mxu0 %v124
    %159 = vmatprep.subr.mxu0 %v127
    %160 = vmatpush1.msra.mxu0 %v126
    %161 = vmatprep.subr.mxu0 %v151
    %162 = vmatpush1.msra.mxu0 %v148
    %163 = vmatprep.subr.mxu0 0.0
    %164 = vmatpush1.msra.mxu0 0.0
    %165 = vmatprep.subr.mxu0 0.0
    %166 = vmatpush1.msra.mxu0 0.0
    %167 = vmatprep.subr.mxu0 0.0
    %168 = vmatpush1.msra.mxu0 0.0
    %169 = vmatprep.subr.mxu0 0.0
    %170 = vmatpush1.msra.mxu0 0.0
    %171 = vmatprep.subr.mxu0 0.0
    %172 = vmatpush1.msra.mxu0 0.0
    %173 = vmatprep.subr.mxu0 0.0
    %174 = vmatpush1.msra.mxu0 0.0
    %175 = vmatprep.subr.mxu0 0.0
    %176 = vmatpush1.msra.mxu0 0.0
    %177 = vmatprep.subr.mxu0 0.0
    %178 = vmatpush1.msra.mxu0 0.0
    %179 = vmatprep.subr.mxu0 0.0
    %180 = vmatpush1.msra.mxu0 0.0
    %181 = vmatprep.subr.mxu0 0.0
    %182 = vmatpush1.msra.mxu0 0.0
    %183 = vmatprep.subr.mxu0 0.0
    %184 = vmatpush1.msra.mxu0 0.0
    %185 = vmatprep.subr.mxu0 0.0
    %186 = vmatpush1.msra.mxu0 0.0
    %187 = vmatprep.subr.mxu0 0.0
    %188 = vmatpush1.msra.mxu0 0.0
    %189 = vmatprep.subr.mxu0 0.0
    %190 = vmatpush1.msra.mxu0 0.0
    %191 = vmatprep.subr.mxu0 0.0
    %192 = vmatpush1.msra.mxu0 0.0
    %193 = vmatprep.subr.mxu0 0.0
    %194 = vmatpush1.msra.mxu0 0.0
    %195 = vmatprep.subr.mxu0 0.0
    %196 = vmatpush1.msra.mxu0 0.0
    %197 = vmatprep.subr.mxu0 0.0
    %198 = vmatpush1.msra.mxu0 0.0
    %199 = vmatprep.subr.mxu0 0.0
    %200 = vmatpush1.msra.mxu0 0.0
    %201 = vmatprep.subr.mxu0 0.0
    %202 = vmatpush1.msra.mxu0 0.0
    %203 = vmatprep.subr.mxu0 0.0
    %204 = vmatpush1.msra.mxu0 0.0
    %205 = vmatprep.subr.mxu0 0.0
    %206 = vmatpush1.msra.mxu0 0.0
    %207 = vmatprep.subr.mxu0 0.0
    %208 = vmatpush1.msra.mxu0 0.0
    %209 = vmatprep.subr.mxu0 0.0
    %210 = vmatpush1.msra.mxu0 0.0
    %211 = vmatprep.subr.mxu0 0.0
    %212 = vmatpush1.msra.mxu0 0.0
    %213 = vmatprep.subr.mxu0 0.0
    %214 = vmatpush1.msra.mxu0 0.0
    %215 = vmatprep.subr.mxu0 0.0
    %216 = vmatpush1.msra.mxu0 0.0
    %217 = vmatprep.mubr.f32.mxu0 0.0
    %218 = vmatmul.mubr.f32.gmra.mrb[0].mxu0 %v144
    %v219 = vpop.f32.mrb[0].mxu0
    %v220 = vadd.f32 %v135, %v219
    %v221 = vpop.f32.mrb[0].mxu0
    %v222 = vadd.f32 %v139, %v221
    %223 = vdwg.mxu0
    %v224 = vmax.f32 %v220, 0.0
    %v225 = vmax.f32 %v222, 0.0
    %v226 = vld [vmem:[#allocation7] sm:$0xff]
    %v227 = vld [vmem:[#allocation7 + $0x8] sm:$0xff]
    %v228 = vld [vmem:[#allocation7 + $0x10] sm:$0xff]
    %v229 = vld [vmem:[#allocation7 + $0x18] sm:$0xff]
    %v230 = vld [vmem:[#allocation7 + $0x20] sm:$0xff]
    %v231 = vld [vmem:[#allocation7 + $0x28] sm:$0xff]
    %v232 = vld [vmem:[#allocation7 + $0x30] sm:$0xff]
    %v233 = vld [vmem:[#allocation7 + $0x38] sm:$0xff]
    %v234 = vld [vmem:[#allocation7 + $0x40] sm:$0xff]
    %v235 = vld [vmem:[#allocation7 + $0x48] sm:$0xff]
    %v236 = vld [vmem:[#allocation7 + $0x50] sm:$0xff]
    %v237 = vld [vmem:[#allocation7 + $0x58] sm:$0xff]
    %v238 = vld [vmem:[#allocation7 + $0x60] sm:$0xff]
    %v239 = vld [vmem:[#allocation7 + $0x68] sm:$0xff]
    %v240 = vld [vmem:[#allocation7 + $0x70] sm:$0xff]
    %v241 = vld [vmem:[#allocation7 + $0x78] sm:$0xff]
    %v242 = vld [vmem:[#allocation7 + $0x80] sm:$0xff]
    %v243 = vld [vmem:[#allocation7 + $0x88] sm:$0xff]
    %v244 = vld [vmem:[#allocation7 + $0x90] sm:$0xff]
    %v245 = vld [vmem:[#allocation7 + $0x98] sm:$0xff]
    %v246 = vld [vmem:[#allocation7 + $0xa0] sm:$0xff]
    %v247 = vld [vmem:[#allocation7 + $0xa8] sm:$0xff]
    %v248 = vld [vmem:[#allocation7 + $0xb0] sm:$0xff]
    %v249 = vld [vmem:[#allocation7 + $0xb8] sm:$0xff]
    %v250 = vld [vmem:[#allocation7 + $0xc0] sm:$0xff]
    %v251 = vld [vmem:[#allocation7 + $0xc8] sm:$0xff]
    %v252 = vld [vmem:[#allocation7 + $0xd0] sm:$0xff]
    %v253 = vld [vmem:[#allocation7 + $0xd8] sm:$0xff]
    %v254 = vld [vmem:[#allocation7 + $0xe0] sm:$0xff]
    %v255 = vld [vmem:[#allocation7 + $0xe8] sm:$0xff]
    %v256 = vld [vmem:[#allocation7 + $0xf0] sm:$0xff]
    %v257 = vld [vmem:[#allocation7 + $0xf8] sm:$0xff]
    %v258 = vld [vmem:[#allocation7 + $0x100] sm:$0xff]
    %v259 = vld [vmem:[#allocation7 + $0x108] sm:$0xff]
    %v260 = vld [vmem:[#allocation7 + $0x110] sm:$0xff]
    %v261 = vld [vmem:[#allocation7 + $0x118] sm:$0xff]
    %v262 = vld [vmem:[#allocation7 + $0x120] sm:$0xff]
    %v263 = vld [vmem:[#allocation7 + $0x128] sm:$0xff]
    %v264 = vld [vmem:[#allocation7 + $0x130] sm:$0xff]
    %v265 = vld [vmem:[#allocation7 + $0x138] sm:$0xff]
    %v266 = vld [vmem:[#allocation7 + $0x140] sm:$0xff]
    %v267 = vld [vmem:[#allocation7 + $0x148] sm:$0xff]
    %v268 = vld [vmem:[#allocation7 + $0x150] sm:$0xff]
    %v269 = vld [vmem:[#allocation7 + $0x158] sm:$0xff]
    %v270 = vld [vmem:[#allocation7 + $0x160] sm:$0xff]
    %v271 = vld [vmem:[#allocation7 + $0x168] sm:$0xff]
    %v272 = vld [vmem:[#allocation7 + $0x170] sm:$0xff]
    %v273 = vld [vmem:[#allocation7 + $0x178] sm:$0xff]
    %v274 = vld [vmem:[#allocation7 + $0x180] sm:$0xff]
    %v275 = vld [vmem:[#allocation7 + $0x188] sm:$0xff]
    %v276 = vld [vmem:[#allocation7 + $0x190] sm:$0xff]
    %v277 = vld [vmem:[#allocation7 + $0x198] sm:$0xff]
    %v278 = vld [vmem:[#allocation7 + $0x1a0] sm:$0xff]
    %v279 = vld [vmem:[#allocation7 + $0x1a8] sm:$0xff]
    %v280 = vld [vmem:[#allocation7 + $0x1b0] sm:$0xff]
    %v281 = vld [vmem:[#allocation7 + $0x1b8] sm:$0xff]
    %v282 = vld [vmem:[#allocation7 + $0x1c0] sm:$0xff]
    %v283 = vld [vmem:[#allocation7 + $0x1c8] sm:$0xff]
    %v284 = vld [vmem:[#allocation7 + $0x1d0] sm:$0xff]
    %v285 = vld [vmem:[#allocation7 + $0x1d8] sm:$0xff]
    %v286 = vld [vmem:[#allocation7 + $0x1e0] sm:$0xff]
    %v287 = vld [vmem:[#allocation7 + $0x1e8] sm:$0xff]
    %v288 = vld [vmem:[#allocation7 + $0x1f0] sm:$0xff]
    %v289 = vld [vmem:[#allocation7 + $0x1f8] sm:$0xff]
    %v290 = vld [vmem:[#allocation7 + $0x200] sm:$0xff]
    %v291 = vld [vmem:[#allocation7 + $0x208] sm:$0xff]
    %v292 = vld [vmem:[#allocation7 + $0x210] sm:$0xff]
    %v293 = vld [vmem:[#allocation7 + $0x218] sm:$0xff]
    %v294 = vld [vmem:[#allocation7 + $0x220] sm:$0xff]
    %v295 = vld [vmem:[#allocation7 + $0x228] sm:$0xff]
    %v296 = vld [vmem:[#allocation7 + $0x230] sm:$0xff]
    %v297 = vld [vmem:[#allocation7 + $0x238] sm:$0xff]
    %v298 = vld [vmem:[#allocation7 + $0x240] sm:$0xff]
    %v299 = vld [vmem:[#allocation7 + $0x248] sm:$0xff]
    %v300 = vld [vmem:[#allocation7 + $0x250] sm:$0xff]
    %v301 = vld [vmem:[#allocation7 + $0x258] sm:$0xff]
    %v302 = vld [vmem:[#allocation7 + $0x260] sm:$0xff]
    %v303 = vld [vmem:[#allocation7 + $0x268] sm:$0xff]
    %v304 = vld [vmem:[#allocation7 + $0x270] sm:$0xff]
    %v305 = vld [vmem:[#allocation7 + $0x278] sm:$0xff]
    %v306 = vld [vmem:[#allocation7 + $0x280] sm:$0xff]
    %v307 = vld [vmem:[#allocation7 + $0x288] sm:$0xff]
    %v308 = vld [vmem:[#allocation7 + $0x290] sm:$0xff]
    %v309 = vld [vmem:[#allocation7 + $0x298] sm:$0xff]
    %v310 = vld [vmem:[#allocation7 + $0x2a0] sm:$0xff]
    %v311 = vld [vmem:[#allocation7 + $0x2a8] sm:$0xff]
    %v312 = vld [vmem:[#allocation7 + $0x2b0] sm:$0xff]
    %v313 = vld [vmem:[#allocation7 + $0x2b8] sm:$0xff]
    %v314 = vld [vmem:[#allocation7 + $0x2c0] sm:$0xff]
    %v315 = vld [vmem:[#allocation7 + $0x2c8] sm:$0xff]
    %v316 = vld [vmem:[#allocation7 + $0x2d0] sm:$0xff]
    %v317 = vld [vmem:[#allocation7 + $0x2d8] sm:$0xff]
    %v318 = vld [vmem:[#allocation7 + $0x2e0] sm:$0xff]
    %v319 = vld [vmem:[#allocation7 + $0x2e8] sm:$0xff]
    %v320 = vld [vmem:[#allocation7 + $0x2f0] sm:$0xff]
    %v321 = vld [vmem:[#allocation7 + $0x2f8] sm:$0xff]
    %v322 = vld [vmem:[#allocation7 + $0x300] sm:$0xff]
    %v323 = vld [vmem:[#allocation7 + $0x308] sm:$0xff]
    %v324 = vld [vmem:[#allocation7 + $0x310] sm:$0xff]
    %v325 = vld [vmem:[#allocation7 + $0x318] sm:$0xff]
    %v326 = vld [vmem:[#allocation7 + $0x320] sm:$0xff]
    %v327 = vld [vmem:[#allocation7 + $0x328] sm:$0xff]
    %v328 = vld [vmem:[#allocation7 + $0x330] sm:$0xff]
    %v329 = vld [vmem:[#allocation7 + $0x338] sm:$0xff]
    %v330 = vld [vmem:[#allocation7 + $0x340] sm:$0xff]
    %v331 = vld [vmem:[#allocation7 + $0x348] sm:$0xff]
    %v332 = vld [vmem:[#allocation7 + $0x350] sm:$0xff]
    %v333 = vld [vmem:[#allocation7 + $0x358] sm:$0xff]
    %v334 = vld [vmem:[#allocation7 + $0x360] sm:$0xff]
    %v335 = vld [vmem:[#allocation7 + $0x368] sm:$0xff]
    %v336 = vld [vmem:[#allocation7 + $0x370] sm:$0xff]
    %v337 = vld [vmem:[#allocation7 + $0x378] sm:$0xff]
    %v338 = vld [vmem:[#allocation7 + $0x380] sm:$0xff]
    %v339 = vld [vmem:[#allocation7 + $0x388] sm:$0xff]
    %v340 = vld [vmem:[#allocation7 + $0x390] sm:$0xff]
    %v341 = vld [vmem:[#allocation7 + $0x398] sm:$0xff]
    %v342 = vld [vmem:[#allocation7 + $0x3a0] sm:$0xff]
    %v343 = vld [vmem:[#allocation7 + $0x3a8] sm:$0xff]
    %v344 = vld [vmem:[#allocation7 + $0x3b0] sm:$0xff]
    %v345 = vld [vmem:[#allocation7 + $0x3b8] sm:$0xff]
    %v346 = vld [vmem:[#allocation7 + $0x3c0] sm:$0xff]
    %v347 = vld [vmem:[#allocation7 + $0x3c8] sm:$0xff]
    %v348 = vld [vmem:[#allocation7 + $0x3d0] sm:$0xff]
    %v349 = vld [vmem:[#allocation7 + $0x3d8] sm:$0xff]
    %v350 = vld [vmem:[#allocation7 + $0x3e0] sm:$0xff]
    %v351 = vld [vmem:[#allocation7 + $0x3e8] sm:$0xff]
    %v352 = vld [vmem:[#allocation7 + $0x3f0] sm:$0xff]
    %v353 = vld [vmem:[#allocation7 + $0x3f8] sm:$0xff]
    %v354 = vld [vmem:[%s7] sm:$0xf]
    %v356 = vlaneseq
    %v357 = vshrl.u32 %v356, 7
    %v358 = vsub.s32 0, %v357
    %v359 = vrot.slane %v354, %v358
    %v360 = vlaneseq
    %v361 = vshrl.u32 %v360, 7
    %v362 = vsub.s32 1, %v361
    %v363 = vrot.slane %v354, %v362
    %v364 = vlaneseq
    %v365 = vshrl.u32 %v364, 7
    %v366 = vsub.s32 2, %v365
    %v367 = vrot.slane %v354, %v366
    %v368 = vlaneseq
    %v369 = vshrl.u32 %v368, 7
    %v370 = vsub.s32 3, %v369
    %v371 = vrot.slane %v354, %v370
    %376 = vmatprep.subr.mxu0 %v227
    %377 = vmatpush1.msra.mxu0 %v226
    %378 = vmatprep.subr.mxu0 %v231
    %379 = vmatpush1.msra.mxu0 %v230
    %380 = vmatprep.subr.mxu0 %v235
    %381 = vmatpush1.msra.mxu0 %v234
    %382 = vmatprep.subr.mxu0 %v239
    %383 = vmatpush1.msra.mxu0 %v238
    %384 = vmatprep.subr.mxu0 %v243
    %385 = vmatpush1.msra.mxu0 %v242
    %386 = vmatprep.subr.mxu0 %v247
    %387 = vmatpush1.msra.mxu0 %v246
    %388 = vmatprep.subr.mxu0 %v251
    %389 = vmatpush1.msra.mxu0 %v250
    %390 = vmatprep.subr.mxu0 %v255
    %391 = vmatpush1.msra.mxu0 %v254
    %392 = vmatprep.subr.mxu0 %v259
    %393 = vmatpush1.msra.mxu0 %v258
    %394 = vmatprep.subr.mxu0 %v263
    %395 = vmatpush1.msra.mxu0 %v262
    %396 = vmatprep.subr.mxu0 %v267
    %397 = vmatpush1.msra.mxu0 %v266
    %398 = vmatprep.subr.mxu0 %v271
    %399 = vmatpush1.msra.mxu0 %v270
    %400 = vmatprep.subr.mxu0 %v275
    %401 = vmatpush1.msra.mxu0 %v274
    %402 = vmatprep.subr.mxu0 %v279
    %403 = vmatpush1.msra.mxu0 %v278
    %404 = vmatprep.subr.mxu0 %v283
    %405 = vmatpush1.msra.mxu0 %v282
    %406 = vmatprep.subr.mxu0 %v287
    %407 = vmatpush1.msra.mxu0 %v286
    %408 = vmatprep.subr.mxu0 %v291
    %409 = vmatpush1.msra.mxu0 %v290
    %410 = vmatprep.subr.mxu0 %v295
    %411 = vmatpush1.msra.mxu0 %v294
    %412 = vmatprep.subr.mxu0 %v299
    %413 = vmatpush1.msra.mxu0 %v298
    %414 = vmatprep.subr.mxu0 %v303
    %415 = vmatpush1.msra.mxu0 %v302
    %416 = vmatprep.subr.mxu0 %v307
    %417 = vmatpush1.msra.mxu0 %v306
    %418 = vmatprep.subr.mxu0 %v311
    %419 = vmatpush1.msra.mxu0 %v310
    %420 = vmatprep.subr.mxu0 %v315
    %421 = vmatpush1.msra.mxu0 %v314
    %422 = vmatprep.subr.mxu0 %v319
    %423 = vmatpush1.msra.mxu0 %v318
    %424 = vmatprep.subr.mxu0 %v323
    %425 = vmatpush1.msra.mxu0 %v322
    %426 = vmatprep.subr.mxu0 %v327
    %427 = vmatpush1.msra.mxu0 %v326
    %428 = vmatprep.subr.mxu0 %v331
    %429 = vmatpush1.msra.mxu0 %v330
    %430 = vmatprep.subr.mxu0 %v335
    %431 = vmatpush1.msra.mxu0 %v334
    %432 = vmatprep.subr.mxu0 %v339
    %433 = vmatpush1.msra.mxu0 %v338
    %434 = vmatprep.subr.mxu0 %v343
    %435 = vmatpush1.msra.mxu0 %v342
    %436 = vmatprep.subr.mxu0 %v347
    %437 = vmatpush1.msra.mxu0 %v346
    %438 = vmatprep.subr.mxu0 %v351
    %439 = vmatpush1.msra.mxu0 %v350
    %440 = vmatprep.mubr.f32.mxu0 %v225
    %441 = vmatmul.mubr.f32.gmra.mrb[0].mxu0 %v224
    %v442 = vpop.f32.mrb[0].mxu0
    %v443 = vadd.f32 %v359, %v442
    %v444 = vpop.f32.mrb[0].mxu0
    %v445 = vadd.f32 %v363, %v444
    %446 = vdwg.mxu0
    %447 = vmatprep.subr.mxu0 %v229
    %448 = vmatpush1.msra.mxu0 %v228
    %449 = vmatprep.subr.mxu0 %v233
    %450 = vmatpush1.msra.mxu0 %v232
    %451 = vmatprep.subr.mxu0 %v237
    %452 = vmatpush1.msra.mxu0 %v236
    %453 = vmatprep.subr.mxu0 %v241
    %454 = vmatpush1.msra.mxu0 %v240
    %455 = vmatprep.subr.mxu0 %v245
    %456 = vmatpush1.msra.mxu0 %v244
    %457 = vmatprep.subr.mxu0 %v249
    %458 = vmatpush1.msra.mxu0 %v248
    %459 = vmatprep.subr.mxu0 %v253
    %460 = vmatpush1.msra.mxu0 %v252
    %461 = vmatprep.subr.mxu0 %v257
    %462 = vmatpush1.msra.mxu0 %v256
    %463 = vmatprep.subr.mxu0 %v261
    %464 = vmatpush1.msra.mxu0 %v260
    %465 = vmatprep.subr.mxu0 %v265
    %466 = vmatpush1.msra.mxu0 %v264
    %467 = vmatprep.subr.mxu0 %v269
    %468 = vmatpush1.msra.mxu0 %v268
    %469 = vmatprep.subr.mxu0 %v273
    %470 = vmatpush1.msra.mxu0 %v272
    %471 = vmatprep.subr.mxu0 %v277
    %472 = vmatpush1.msra.mxu0 %v276
    %473 = vmatprep.subr.mxu0 %v281
    %474 = vmatpush1.msra.mxu0 %v280
    %475 = vmatprep.subr.mxu0 %v285
    %476 = vmatpush1.msra.mxu0 %v284
    %477 = vmatprep.subr.mxu0 %v289
    %478 = vmatpush1.msra.mxu0 %v288
    %479 = vmatprep.subr.mxu0 %v293
    %480 = vmatpush1.msra.mxu0 %v292
    %481 = vmatprep.subr.mxu0 %v297
    %482 = vmatpush1.msra.mxu0 %v296
    %483 = vmatprep.subr.mxu0 %v301
    %484 = vmatpush1.msra.mxu0 %v300
    %485 = vmatprep.subr.mxu0 %v305
    %486 = vmatpush1.msra.mxu0 %v304
    %487 = vmatprep.subr.mxu0 %v309
    %488 = vmatpush1.msra.mxu0 %v308
    %489 = vmatprep.subr.mxu0 %v313
    %490 = vmatpush1.msra.mxu0 %v312
    %491 = vmatprep.subr.mxu0 %v317
    %492 = vmatpush1.msra.mxu0 %v316
    %493 = vmatprep.subr.mxu0 %v321
    %494 = vmatpush1.msra.mxu0 %v320
    %495 = vmatprep.subr.mxu0 %v325
    %496 = vmatpush1.msra.mxu0 %v324
    %497 = vmatprep.subr.mxu0 %v329
    %498 = vmatpush1.msra.mxu0 %v328
    %499 = vmatprep.subr.mxu0 %v333
    %500 = vmatpush1.msra.mxu0 %v332
    %501 = vmatprep.subr.mxu0 %v337
    %502 = vmatpush1.msra.mxu0 %v336
    %503 = vmatprep.subr.mxu0 %v341
    %504 = vmatpush1.msra.mxu0 %v340
    %505 = vmatprep.subr.mxu0 %v345
    %506 = vmatpush1.msra.mxu0 %v344
    %507 = vmatprep.subr.mxu0 %v349
    %508 = vmatpush1.msra.mxu0 %v348
    %509 = vmatprep.subr.mxu0 %v353
    %510 = vmatpush1.msra.mxu0 %v352
    %511 = vmatprep.mubr.f32.mxu0 %v225
    %512 = vmatmul.mubr.f32.gmra.mrb[0].mxu0 %v224
    %v513 = vpop.f32.mrb[0].mxu0
    %v514 = vadd.f32 %v367, %v513
    %v515 = vpop.f32.mrb[0].mxu0
    %v516 = vadd.f32 %v371, %v515
    %517 = vdwg.mxu0
    %v518 = vmax.f32 %v443, 0.0
    %v519 = vmax.f32 %v445, 0.0
    %v520 = vmax.f32 %v514, 0.0
    %v521 = vmax.f32 %v516, 0.0
    %v522 = vmax.f32 %v518, %v520
    %v523 = vmax.f32 %v519, %v521
    %v524 = vld [vmem:[#allocation8] sm:$0xff]
    %v525 = vld [vmem:[#allocation8 + $0x8] sm:$0xff]
    %v526 = vld [vmem:[#allocation8 + $0x10] sm:$0xff]
    %v527 = vld [vmem:[#allocation8 + $0x18] sm:$0xff]
    %v528 = vld [vmem:[#allocation8 + $0x20] sm:$0xff]
    %v529 = vld [vmem:[#allocation8 + $0x28] sm:$0xff]
    %v530 = vld [vmem:[#allocation8 + $0x30] sm:$0xff]
    %v531 = vld [vmem:[#allocation8 + $0x38] sm:$0xff]
    %v532 = vld [vmem:[#allocation8 + $0x40] sm:$0xff]
    %v533 = vld [vmem:[#allocation8 + $0x48] sm:$0xff]
    %v534 = vld [vmem:[#allocation8 + $0x50] sm:$0xff]
    %v535 = vld [vmem:[#allocation8 + $0x58] sm:$0xff]
    %v536 = vld [vmem:[#allocation8 + $0x60] sm:$0xff]
    %v537 = vld [vmem:[#allocation8 + $0x68] sm:$0xff]
    %v538 = vld [vmem:[#allocation8 + $0x70] sm:$0xff]
    %v539 = vld [vmem:[#allocation8 + $0x78] sm:$0xff]
    %v540 = vld [vmem:[#allocation8 + $0x80] sm:$0xff]
    %v541 = vld [vmem:[#allocation8 + $0x88] sm:$0xff]
    %v542 = vld [vmem:[#allocation8 + $0x90] sm:$0xff]
    %v543 = vld [vmem:[#allocation8 + $0x98] sm:$0xff]
    %v544 = vld [vmem:[#allocation8 + $0xa0] sm:$0xff]
    %v545 = vld [vmem:[#allocation8 + $0xa8] sm:$0xff]
    %v546 = vld [vmem:[#allocation8 + $0xb0] sm:$0xff]
    %v547 = vld [vmem:[#allocation8 + $0xb8] sm:$0xff]
    %v548 = vld [vmem:[#allocation8 + $0xc0] sm:$0xff]
    %v549 = vld [vmem:[#allocation8 + $0xc8] sm:$0xff]
    %v550 = vld [vmem:[#allocation8 + $0xd0] sm:$0xff]
    %v551 = vld [vmem:[#allocation8 + $0xd8] sm:$0xff]
    %v552 = vld [vmem:[#allocation8 + $0xe0] sm:$0xff]
    %v553 = vld [vmem:[#allocation8 + $0xe8] sm:$0xff]
    %v554 = vld [vmem:[#allocation8 + $0xf0] sm:$0xff]
    %v555 = vld [vmem:[#allocation8 + $0xf8] sm:$0xff]
    %v556 = vld [vmem:[#allocation8 + $0x100] sm:$0xff]
    %v557 = vld [vmem:[#allocation8 + $0x108] sm:$0xff]
    %v558 = vld [vmem:[#allocation8 + $0x110] sm:$0xff]
    %v559 = vld [vmem:[#allocation8 + $0x118] sm:$0xff]
    %v560 = vld [vmem:[#allocation8 + $0x120] sm:$0xff]
    %v561 = vld [vmem:[#allocation8 + $0x128] sm:$0xff]
    %v562 = vld [vmem:[#allocation8 + $0x130] sm:$0xff]
    %v563 = vld [vmem:[#allocation8 + $0x138] sm:$0xff]
    %v564 = vld [vmem:[#allocation8 + $0x140] sm:$0xff]
    %v565 = vld [vmem:[#allocation8 + $0x148] sm:$0xff]
    %v566 = vld [vmem:[#allocation8 + $0x150] sm:$0xff]
    %v567 = vld [vmem:[#allocation8 + $0x158] sm:$0xff]
    %v568 = vld [vmem:[#allocation8 + $0x160] sm:$0xff]
    %v569 = vld [vmem:[#allocation8 + $0x168] sm:$0xff]
    %v570 = vld [vmem:[#allocation8 + $0x170] sm:$0xff]
    %v571 = vld [vmem:[#allocation8 + $0x178] sm:$0xff]
    %v572 = vld [vmem:[#allocation8 + $0x180] sm:$0xff]
    %v573 = vld [vmem:[#allocation8 + $0x188] sm:$0xff]
    %v574 = vld [vmem:[#allocation8 + $0x190] sm:$0xff]
    %v575 = vld [vmem:[#allocation8 + $0x198] sm:$0xff]
    %v576 = vld [vmem:[#allocation8 + $0x1a0] sm:$0xff]
    %v577 = vld [vmem:[#allocation8 + $0x1a8] sm:$0xff]
    %v578 = vld [vmem:[#allocation8 + $0x1b0] sm:$0xff]
    %v579 = vld [vmem:[#allocation8 + $0x1b8] sm:$0xff]
    %v580 = vld [vmem:[#allocation8 + $0x1c0] sm:$0xff]
    %v581 = vld [vmem:[#allocation8 + $0x1c8] sm:$0xff]
    %v582 = vld [vmem:[#allocation8 + $0x1d0] sm:$0xff]
    %v583 = vld [vmem:[#allocation8 + $0x1d8] sm:$0xff]
    %v584 = vld [vmem:[#allocation8 + $0x1e0] sm:$0xff]
    %v585 = vld [vmem:[#allocation8 + $0x1e8] sm:$0xff]
    %v586 = vld [vmem:[#allocation8 + $0x1f0] sm:$0xff]
    %v587 = vld [vmem:[#allocation8 + $0x1f8] sm:$0xff]
    %v588 = vld [vmem:[%s8] sm:$0x3]
    %v590 = vlaneseq
    %v591 = vshrl.u32 %v590, 7
    %v592 = vsub.s32 0, %v591
    %v593 = vrot.slane %v588, %v592
    %v594 = vlaneseq
    %v595 = vshrl.u32 %v594, 7
    %v596 = vsub.s32 1, %v595
    %v597 = vrot.slane %v588, %v596
    %600 = vmatprep.subr.mxu0 %v525
    %601 = vmatpush1.msra.mxu0 %v524
    %602 = vmatprep.subr.mxu0 %v527
    %603 = vmatpush1.msra.mxu0 %v526
    %604 = vmatprep.subr.mxu0 %v529
    %605 = vmatpush1.msra.mxu0 %v528
    %606 = vmatprep.subr.mxu0 %v531
    %607 = vmatpush1.msra.mxu0 %v530
    %608 = vmatprep.subr.mxu0 %v533
    %609 = vmatpush1.msra.mxu0 %v532
    %610 = vmatprep.subr.mxu0 %v535
    %611 = vmatpush1.msra.mxu0 %v534
    %612 = vmatprep.subr.mxu0 %v537
    %613 = vmatpush1.msra.mxu0 %v536
    %614 = vmatprep.subr.mxu0 %v539
    %615 = vmatpush1.msra.mxu0 %v538
    %616 = vmatprep.subr.mxu0 %v541
    %617 = vmatpush1.msra.mxu0 %v540
    %618 = vmatprep.subr.mxu0 %v543
    %619 = vmatpush1.msra.mxu0 %v542
    %620 = vmatprep.subr.mxu0 %v545
    %621 = vmatpush1.msra.mxu0 %v544
    %622 = vmatprep.subr.mxu0 %v547
    %623 = vmatpush1.msra.mxu0 %v546
    %624 = vmatprep.subr.mxu0 %v549
    %625 = vmatpush1.msra.mxu0 %v548
    %626 = vmatprep.subr.mxu0 %v551
    %627 = vmatpush1.msra.mxu0 %v550
    %628 = vmatprep.subr.mxu0 %v553
    %629 = vmatpush1.msra.mxu0 %v552
    %630 = vmatprep.subr.mxu0 %v555
    %631 = vmatpush1.msra.mxu0 %v554
    %632 = vmatprep.subr.mxu0 %v557
    %633 = vmatpush1.msra.mxu0 %v556
    %634 = vmatprep.subr.mxu0 %v559
    %635 = vmatpush1.msra.mxu0 %v558
    %636 = vmatprep.subr.mxu0 %v561
    %637 = vmatpush1.msra.mxu0 %v560
    %638 = vmatprep.subr.mxu0 %v563
    %639 = vmatpush1.msra.mxu0 %v562
    %640 = vmatprep.subr.mxu0 %v565
    %641 = vmatpush1.msra.mxu0 %v564
    %642 = vmatprep.subr.mxu0 %v567
    %643 = vmatpush1.msra.mxu0 %v566
    %644 = vmatprep.subr.mxu0 %v569
    %645 = vmatpush1.msra.mxu0 %v568
    %646 = vmatprep.subr.mxu0 %v571
    %647 = vmatpush1.msra.mxu0 %v570
    %648 = vmatprep.subr.mxu0 %v573
    %649 = vmatpush1.msra.mxu0 %v572
    %650 = vmatprep.subr.mxu0 %v575
    %651 = vmatpush1.msra.mxu0 %v574
    %652 = vmatprep.subr.mxu0 %v577
    %653 = vmatpush1.msra.mxu0 %v576
    %654 = vmatprep.subr.mxu0 %v579
    %655 = vmatpush1.msra.mxu0 %v578
    %656 = vmatprep.subr.mxu0 %v581
    %657 = vmatpush1.msra.mxu0 %v580
    %658 = vmatprep.subr.mxu0 %v583
    %659 = vmatpush1.msra.mxu0 %v582
    %660 = vmatprep.subr.mxu0 %v585
    %661 = vmatpush1.msra.mxu0 %v584
    %662 = vmatprep.subr.mxu0 %v587
    %663 = vmatpush1.msra.mxu0 %v586
    %664 = vmatprep.mubr.f32.mxu0 %v523
    %665 = vmatmul.mubr.f32.gmra.mrb[0].mxu0 %v522
    %v666 = vpop.f32.mrb[0].mxu0
    %v667 = vadd.f32 %v593, %v666
    %v668 = vpop.f32.mrb[0].mxu0
    %v669 = vadd.f32 %v597, %v668
    %670 = vdwg.mxu0
    %v671 = vmax.f32 %v667, 0.0
    %v672 = vmax.f32 %v669, 0.0
    %v673 = vmax.f32 %v671, %v672
    %v674 = vld [vmem:[#allocation10] sm:$0xff]
    %v675 = vld [vmem:[#allocation10 + $0x8] sm:$0xff]
    %v676 = vld [vmem:[#allocation10 + $0x10] sm:$0xff]
    %v677 = vld [vmem:[#allocation10 + $0x18] sm:$0xff]
    %v678 = vld [vmem:[#allocation10 + $0x20] sm:$0xff]
    %v679 = vld [vmem:[#allocation10 + $0x28] sm:$0xff]
    %v680 = vld [vmem:[#allocation10 + $0x30] sm:$0xff]
    %v681 = vld [vmem:[#allocation10 + $0x38] sm:$0xff]
    %v682 = vld [vmem:[#allocation10 + $0x40] sm:$0xff]
    %v683 = vld [vmem:[#allocation10 + $0x48] sm:$0xff]
    %v684 = vld [vmem:[#allocation10 + $0x50] sm:$0xff]
    %v685 = vld [vmem:[#allocation10 + $0x58] sm:$0xff]
    %v686 = vld [vmem:[#allocation10 + $0x60] sm:$0xff]
    %v687 = vld [vmem:[#allocation10 + $0x68] sm:$0xff]
    %v688 = vld [vmem:[#allocation10 + $0x70] sm:$0xff]
    %v689 = vld [vmem:[#allocation10 + $0x78] sm:$0xff]
    %v690 = vld [vmem:[#allocation10 + $0x80] sm:$0xff]
    %v691 = vld [vmem:[#allocation10 + $0x88] sm:$0xff]
    %v692 = vld [vmem:[#allocation10 + $0x90] sm:$0xff]
    %v693 = vld [vmem:[#allocation10 + $0x98] sm:$0xff]
    %v694 = vld [vmem:[#allocation10 + $0xa0] sm:$0xff]
    %v695 = vld [vmem:[#allocation10 + $0xa8] sm:$0xff]
    %v696 = vld [vmem:[#allocation10 + $0xb0] sm:$0xff]
    %v697 = vld [vmem:[#allocation10 + $0xb8] sm:$0xff]
    %v698 = vld [vmem:[#allocation10 + $0xc0] sm:$0xff]
    %v699 = vld [vmem:[#allocation10 + $0xc8] sm:$0xff]
    %v700 = vld [vmem:[#allocation10 + $0xd0] sm:$0xff]
    %v701 = vld [vmem:[#allocation10 + $0xd8] sm:$0xff]
    %v702 = vld [vmem:[#allocation10 + $0xe0] sm:$0xff]
    %v703 = vld [vmem:[#allocation10 + $0xe8] sm:$0xff]
    %v704 = vld [vmem:[#allocation10 + $0xf0] sm:$0xff]
    %v705 = vld [vmem:[#allocation10 + $0xf8] sm:$0xff]
    %v706 = vld [vmem:[%s9] sm:$0x3]
    %v708 = vlaneseq
    %v709 = vshrl.u32 %v708, 7
    %v710 = vsub.s32 0, %v709
    %v711 = vrot.slane %v706, %v710
    %v712 = vlaneseq
    %v713 = vshrl.u32 %v712, 7
    %v714 = vsub.s32 1, %v713
    %v715 = vrot.slane %v706, %v714
    %718 = vmatprep.subr.mxu0 %v675
    %719 = vmatpush1.msra.mxu0 %v674
    %720 = vmatprep.subr.mxu0 %v677
    %721 = vmatpush1.msra.mxu0 %v676
    %722 = vmatprep.subr.mxu0 %v679
    %723 = vmatpush1.msra.mxu0 %v678
    %724 = vmatprep.subr.mxu0 %v681
    %725 = vmatpush1.msra.mxu0 %v680
    %726 = vmatprep.subr.mxu0 %v683
    %727 = vmatpush1.msra.mxu0 %v682
    %728 = vmatprep.subr.mxu0 %v685
    %729 = vmatpush1.msra.mxu0 %v684
    %730 = vmatprep.subr.mxu0 %v687
    %731 = vmatpush1.msra.mxu0 %v686
    %732 = vmatprep.subr.mxu0 %v689
    %733 = vmatpush1.msra.mxu0 %v688
    %734 = vmatprep.subr.mxu0 %v691
    %735 = vmatpush1.msra.mxu0 %v690
    %736 = vmatprep.subr.mxu0 %v693
    %737 = vmatpush1.msra.mxu0 %v692
    %738 = vmatprep.subr.mxu0 %v695
    %739 = vmatpush1.msra.mxu0 %v694
    %740 = vmatprep.subr.mxu0 %v697
    %741 = vmatpush1.msra.mxu0 %v696
    %742 = vmatprep.subr.mxu0 %v699
    %743 = vmatpush1.msra.mxu0 %v698
    %744 = vmatprep.subr.mxu0 %v701
    %745 = vmatpush1.msra.mxu0 %v700
    %746 = vmatprep.subr.mxu0 %v703
    %747 = vmatpush1.msra.mxu0 %v702
    %748 = vmatprep.subr.mxu0 %v705
    %749 = vmatpush1.msra.mxu0 %v704
    %750 = vmatprep.subr.mxu0 0.0
    %751 = vmatpush1.msra.mxu0 0.0
    %752 = vmatprep.subr.mxu0 0.0
    %753 = vmatpush1.msra.mxu0 0.0
    %754 = vmatprep.subr.mxu0 0.0
    %755 = vmatpush1.msra.mxu0 0.0
    %756 = vmatprep.subr.mxu0 0.0
    %757 = vmatpush1.msra.mxu0 0.0
    %758 = vmatprep.subr.mxu0 0.0
    %759 = vmatpush1.msra.mxu0 0.0
    %760 = vmatprep.subr.mxu0 0.0
    %761 = vmatpush1.msra.mxu0 0.0
    %762 = vmatprep.subr.mxu0 0.0
    %763 = vmatpush1.msra.mxu0 0.0
    %764 = vmatprep.subr.mxu0 0.0
    %765 = vmatpush1.msra.mxu0 0.0
    %766 = vmatprep.subr.mxu0 0.0
    %767 = vmatpush1.msra.mxu0 0.0
    %768 = vmatprep.subr.mxu0 0.0
    %769 = vmatpush1.msra.mxu0 0.0
    %770 = vmatprep.subr.mxu0 0.0
    %771 = vmatpush1.msra.mxu0 0.0
    %772 = vmatprep.subr.mxu0 0.0
    %773 = vmatpush1.msra.mxu0 0.0
    %774 = vmatprep.subr.mxu0 0.0
    %775 = vmatpush1.msra.mxu0 0.0
    %776 = vmatprep.subr.mxu0 0.0
    %777 = vmatpush1.msra.mxu0 0.0
    %778 = vmatprep.subr.mxu0 0.0
    %779 = vmatpush1.msra.mxu0 0.0
    %780 = vmatprep.subr.mxu0 0.0
    %781 = vmatpush1.msra.mxu0 0.0
    %782 = vmatprep.mubr.f32.mxu0 0.0
    %783 = vmatmul.mubr.f32.gmra.mrb[0].mxu0 %v673
    %v784 = vpop.f32.mrb[0].mxu0
    %v785 = vadd.f32 %v711, %v784
    %v786 = vpop.f32.mrb[0].mxu0
    %v787 = vadd.f32 %v715, %v786
    %788 = vdwg.mxu0
    %v789 = vmax.f32 %v785, 0.0
    %v790 = vmax.f32 %v787, 0.0
    %v791 = vld [vmem:[#allocation11] sm:$0xff]
    %v792 = vld [vmem:[#allocation11 + $0x8] sm:$0xff]
    %v793 = vld [vmem:[#allocation11 + $0x10] sm:$0xff]
    %v794 = vld [vmem:[#allocation11 + $0x18] sm:$0xff]
    %v795 = vld [vmem:[#allocation11 + $0x20] sm:$0xff]
    %v796 = vld [vmem:[#allocation11 + $0x28] sm:$0xff]
    %v797 = vld [vmem:[#allocation11 + $0x30] sm:$0xff]
    %v798 = vld [vmem:[#allocation11 + $0x38] sm:$0xff]
    %v799 = vld [vmem:[#allocation11 + $0x40] sm:$0xff]
    %v800 = vld [vmem:[#allocation11 + $0x48] sm:$0xff]
    %v801 = vld [vmem:[#allocation11 + $0x50] sm:$0xff]
    %v802 = vld [vmem:[#allocation11 + $0x58] sm:$0xff]
    %v803 = vld [vmem:[#allocation11 + $0x60] sm:$0xff]
    %v804 = vld [vmem:[#allocation11 + $0x68] sm:$0xff]
    %v805 = vld [vmem:[#allocation11 + $0x70] sm:$0xff]
    %v806 = vld [vmem:[#allocation11 + $0x78] sm:$0xff]
    %v807 = vld [vmem:[#allocation11 + $0x80] sm:$0xff]
    %v808 = vld [vmem:[#allocation11 + $0x88] sm:$0xff]
    %v809 = vld [vmem:[#allocation11 + $0x90] sm:$0xff]
    %v810 = vld [vmem:[#allocation11 + $0x98] sm:$0xff]
    %v811 = vld [vmem:[#allocation11 + $0xa0] sm:$0xff]
    %v812 = vld [vmem:[#allocation11 + $0xa8] sm:$0xff]
    %v813 = vld [vmem:[#allocation11 + $0xb0] sm:$0xff]
    %v814 = vld [vmem:[#allocation11 + $0xb8] sm:$0xff]
    %v815 = vld [vmem:[#allocation11 + $0xc0] sm:$0xff]
    %v816 = vld [vmem:[#allocation11 + $0xc8] sm:$0xff]
    %v817 = vld [vmem:[#allocation11 + $0xd0] sm:$0xff]
    %v818 = vld [vmem:[#allocation11 + $0xd8] sm:$0xff]
    %v819 = vld [vmem:[#allocation11 + $0xe0] sm:$0xff]
    %v820 = vld [vmem:[#allocation11 + $0xe8] sm:$0xff]
    %v821 = vld [vmem:[#allocation11 + $0xf0] sm:$0xff]
    %v822 = vld [vmem:[#allocation11 + $0xf8] sm:$0xff]
    %v823 = vld [vmem:[%s10] sm:$0x1]
    %v825 = vlaneseq
    %v826 = vshrl.u32 %v825, 7
    %v827 = vsub.s32 0, %v826
    %v828 = vrot.slane %v823, %v827
    %830 = vmatprep.subr.mxu0 0.0
    %831 = vmatpush1.msra.mxu0 %v791
    %832 = vmatprep.subr.mxu0 0.0
    %833 = vmatpush1.msra.mxu0 %v792
    %834 = vmatprep.subr.mxu0 0.0
    %835 = vmatpush1.msra.mxu0 %v793
    %836 = vmatprep.subr.mxu0 0.0
    %837 = vmatpush1.msra.mxu0 %v794
    %838 = vmatprep.subr.mxu0 0.0
    %839 = vmatpush1.msra.mxu0 %v795
    %840 = vmatprep.subr.mxu0 0.0
    %841 = vmatpush1.msra.mxu0 %v796
    %842 = vmatprep.subr.mxu0 0.0
    %843 = vmatpush1.msra.mxu0 %v797
    %844 = vmatprep.subr.mxu0 0.0
    %845 = vmatpush1.msra.mxu0 %v798
    %846 = vmatprep.subr.mxu0 0.0
    %847 = vmatpush1.msra.mxu0 %v799
    %848 = vmatprep.subr.mxu0 0.0
    %849 = vmatpush1.msra.mxu0 %v800
    %850 = vmatprep.subr.mxu0 0.0
    %851 = vmatpush1.msra.mxu0 %v801
    %852 = vmatprep.subr.mxu0 0.0
    %853 = vmatpush1.msra.mxu0 %v802
    %854 = vmatprep.subr.mxu0 0.0
    %855 = vmatpush1.msra.mxu0 %v803
    %856 = vmatprep.subr.mxu0 0.0
    %857 = vmatpush1.msra.mxu0 %v804
    %858 = vmatprep.subr.mxu0 0.0
    %859 = vmatpush1.msra.mxu0 %v805
    %860 = vmatprep.subr.mxu0 0.0
    %861 = vmatpush1.msra.mxu0 %v806
    %862 = vmatprep.subr.mxu0 0.0
    %863 = vmatpush1.msra.mxu0 %v807
    %864 = vmatprep.subr.mxu0 0.0
    %865 = vmatpush1.msra.mxu0 %v808
    %866 = vmatprep.subr.mxu0 0.0
    %867 = vmatpush1.msra.mxu0 %v809
    %868 = vmatprep.subr.mxu0 0.0
    %869 = vmatpush1.msra.mxu0 %v810
    %870 = vmatprep.subr.mxu0 0.0
    %871 = vmatpush1.msra.mxu0 %v811
    %872 = vmatprep.subr.mxu0 0.0
    %873 = vmatpush1.msra.mxu0 %v812
    %874 = vmatprep.subr.mxu0 0.0
    %875 = vmatpush1.msra.mxu0 %v813
    %876 = vmatprep.subr.mxu0 0.0
    %877 = vmatpush1.msra.mxu0 %v814
    %878 = vmatprep.subr.mxu0 0.0
    %879 = vmatpush1.msra.mxu0 %v815
    %880 = vmatprep.subr.mxu0 0.0
    %881 = vmatpush1.msra.mxu0 %v816
    %882 = vmatprep.subr.mxu0 0.0
    %883 = vmatpush1.msra.mxu0 %v817
    %884 = vmatprep.subr.mxu0 0.0
    %885 = vmatpush1.msra.mxu0 %v818
    %886 = vmatprep.subr.mxu0 0.0
    %887 = vmatpush1.msra.mxu0 %v819
    %888 = vmatprep.subr.mxu0 0.0
    %889 = vmatpush1.msra.mxu0 %v820
    %890 = vmatprep.subr.mxu0 0.0
    %891 = vmatpush1.msra.mxu0 %v821
    %892 = vmatprep.subr.mxu0 0.0
    %893 = vmatpush1.msra.mxu0 %v822
    %894 = vmatprep.mubr.f32.mxu0 %v790
    %895 = vmatmul.mubr.f32.gmra.mrb[0].mxu0 %v789
    %v896 = vpop.f32.mrb[0].mxu0
    %v897 = vadd.f32 %v828, %v896
    %v898 = vpop.f32.mrb[0].mxu0
    %899 = vdwg.mxu0
    %900 = vmax.xlane.f32.xlu0 %v897
    %v901 = vpop.xlane.xlu0 %900
    %v902 = vsub.f32 %v897, %v901
    %v903 = vmul.f32 %v902, 1.442695
    %v904 = vpow.pop %v903
    %905 = vadd.xlane.f32.xlu0 %v904
    %v906 = vpop.xlane.xlu0 %905
    %v907 = vlog2.pop %v906
    %v908 = vmul.f32 %v907, 0.6931472
    %v909 = vsub.f32 %v902, %v908
    %910 = vst [vmem:[#allocation13] sm:$0xff] %v909
    // Predicated region
    $region70: #{tpu_custom_call.1} parent=1 // pred_check
      _
    $region71: #{tpu_custom_call.1} parent=1 // pred_check_branch
      %912 = sbr.rel (0) target = $region73
    $region72: #{tpu_custom_call.1} parent=1 // pred_region
      %s914 = ssub.s32 128, 128
      %915 = vsyncadd [#allocation4], %s914
      %s917 = sshll.u32 [#allocation13], 4
      %s918 = int_to_ptr.vmem [resolvable:$true] %s917
      %920 = dma.vmem_to_hbm [thread:$0]  %s918, 128, %s11, [#allocation4]
    $region73: #{tpu_custom_call.1} parent=1 // pred_fallthru
      _
    // Predicated region
    $region74: #{tpu_custom_call.1} parent=1 // pred_check
      _
    $region75: #{tpu_custom_call.1} parent=1 // pred_check_branch
      %922 = sbr.rel (0) target = $region77
    $region76: #{tpu_custom_call.1} parent=1 // pred_region
      %923 = dma.done [#allocation4], 128
    $region77: #{tpu_custom_call.1} parent=1 // pred_fallthru
      _
    %924 = vsyncpa [#allocation3], 1
    %925 = vsyncpa [#allocation6], 1
    %926 = vsyncpa [#allocation9], 1
    %927 = vsyncpa [#allocation12], 1
    %928 = vsyncpa [#allocation4], 1

// kernel: tpu_custom_call.1
$region0: #{tpu_custom_call.1}
  #allocation0 [shape = 'u32[]', space=smem, size = 0x4, offset = 0x4, fixed_abs, tag = 'smem constant byte address 0x4 - core index']
  #allocation1 [shape = 'u32[144,128]{1,0:T(1,128)}', space=vmem, size = 0x12000, scoped, tag = 'internal scratch']
  %s0 = inlined_call_operand.hbm [shape: f32[8,39], index: 0, kind: input, shape index: {}]
  %s1 = inlined_call_operand.hbm [shape: f32[39,256], index: 1, kind: input, shape index: {}]
  %s2 = inlined_call_operand.hbm [shape: f32[256,512], index: 2, kind: input, shape index: {}]
  %s3 = inlined_call_operand.hbm [shape: f32[256,256], index: 3, kind: input, shape index: {}]
  %s4 = inlined_call_operand.hbm [shape: f32[128,256], index: 4, kind: input, shape index: {}]
  %s5 = inlined_call_operand.hbm [shape: f32[256,128], index: 5, kind: input, shape index: {}]
  %s6 = inlined_call_operand.vmem [shape: f32[1,256], index: 6, kind: input, shape index: {}]
  %s7 = inlined_call_operand.vmem [shape: f32[1,512], index: 7, kind: input, shape index: {}]
  %s8 = inlined_call_operand.vmem [shape: f32[1,256], index: 8, kind: input, shape index: {}]
  %s9 = inlined_call_operand.vmem [shape: f32[1,256], index: 9, kind: input, shape index: {}]
  %s10 = inlined_call_operand.vmem [shape: f32[1,128], index: 10, kind: input, shape index: {}]
  %s11 = inlined_call_operand.hbm [shape: f32[8,128], index: 11, kind: output, shape index: {}]
  %s12 = sld [smem:[#allocation0]]
  $region78: #{tpu_custom_call.1} parent=0
    _
  %s14 = ssub.s32 1, %s12
  %s15 = scalar_select 0, %s14, %s12
  $region1: #{tpu_custom_call.1} parent=0
    #allocation2 [shape = 'u8[4096]{0}', space=vmem, size = 0x1000, scoped, tag = 'input window, operand 0, single buffered']
    #allocation3 [shape = 's32[1]{0}', space=sflag, size = 0x4, scoped, tag = 'scoped memory for tpu_custom_call.1']
    #allocation4 [shape = 's32[1]{0}', space=sflag, size = 0x4, scoped, tag = 'scoped memory for tpu_custom_call.1']
    #allocation5 [shape = 'u8[40960]{0}', space=vmem, size = 0xa000, scoped, tag = 'input window, operand 1, single buffered']
    #allocation6 [shape = 's32[1]{0}', space=sflag, size = 0x4, scoped, tag = 'scoped memory for tpu_custom_call.1']
    #allocation7 [shape = 'u8[524288]{0}', space=vmem, size = 0x80000, scoped, tag = 'input window, operand 2, single buffered']
    #allocation8 [shape = 'u8[262144]{0}', space=vmem, size = 0x40000, scoped, tag = 'input window, operand 3, single buffered']
    #allocation9 [shape = 's32[1]{0}', space=sflag, size = 0x4, scoped, tag = 'scoped memory for tpu_custom_call.1']
    #allocation10 [shape = 'u8[131072]{0}', space=vmem, size = 0x20000, scoped, tag = 'input window, operand 4, single buffered']
    #allocation11 [shape = 'u8[131072]{0}', space=vmem, size = 0x20000, scoped, tag = 'input window, operand 5, single buffered']
    #allocation12 [shape = 's32[1]{0}', space=sflag, size = 0x4, scoped, tag = 'scoped memory for tpu_custom_call.1']
    #allocation13 [shape = 'u8[4096]{0}', space=vmem, size = 0x1000, scoped, tag = 'output window, operand 0, single buffered']
    %16 = vsyncpa [#allocation3], 0
    %17 = vsyncpa [#allocation6], 0
    %18 = vsyncpa [#allocation9], 0
    %19 = vsyncpa [#allocation12], 0
    %20 = vsyncpa [#allocation4], 0
    // Predicated region
    $region2: #{tpu_custom_call.1} parent=1 // pred_check
      _
    $region3: #{tpu_custom_call.1} parent=1 // pred_check_branch
      %22 = sbr.rel (0) target = $region5
    $region4: #{tpu_custom_call.1} parent=1 // pred_region
      %s24 = ssub.s32 128, 128
      %25 = vsyncadd [#allocation3], %s24
      %s27 = sshll.u32 [#allocation2], 4
      %s28 = int_to_ptr.vmem [resolvable:$true] %s27
      %30 = dma.hbm_to_vmem [thread:$0]  %s0, 128, %s28, [#allocation3]
    $region5: #{tpu_custom_call.1} parent=1 // pred_fallthru
      _
    // Predicated region
    $region6: #{tpu_custom_call.1} parent=1 // pred_check
      _
    $region7: #{tpu_custom_call.1} parent=1 // pred_check_branch
      %32 = sbr.rel (0) target = $region9
    $region8: #{tpu_custom_call.1} parent=1 // pred_region
      %s34 = ssub.s32 1280, 1280
      %35 = vsyncadd [#allocation6], %s34
      %s36 = sshll.u32 [#allocation5], 4
      %s37 = int_to_ptr.vmem [resolvable:$true] %s36
      %42 = dma.hbm_to_vmem [thread:$0]  %s1, 1280, %s37, [#allocation6], 256, 256, 16
    $region9: #{tpu_custom_call.1} parent=1 // pred_fallthru
      _
    // Predicated region
    $region10: #{tpu_custom_call.1} parent=1 // pred_check
      _
    $region11: #{tpu_custom_call.1} parent=1 // pred_check_branch
      %44 = sbr.rel (0) target = $region13
    $region12: #{tpu_custom_call.1} parent=1 // pred_region
      %s46 = ssub.s32 16384, 16384
      %47 = vsyncadd [#allocation6], %s46
      %s48 = sshll.u32 [#allocation7], 4
      %s49 = int_to_ptr.vmem [resolvable:$true] %s48
      %54 = dma.hbm_to_vmem [thread:$0]  %s2, 16384, %s49, [#allocation6], 512, 512, 32
    $region13: #{tpu_custom_call.1} parent=1 // pred_fallthru
      _
    // Predicated region
    $region14: #{tpu_custom_call.1} parent=1 // pred_check
      _
    $region15: #{tpu_custom_call.1} parent=1 // pred_check_branch
      %56 = sbr.rel (0) target = $region17
    $region16: #{tpu_custom_call.1} parent=1 // pred_region
      %s58 = ssub.s32 8192, 8192
      %59 = vsyncadd [#allocation9], %s58
      %s60 = sshll.u32 [#allocation8], 4
      %s61 = int_to_ptr.vmem [resolvable:$true] %s60
      %66 = dma.hbm_to_vmem [thread:$0]  %s3, 8192, %s61, [#allocation9], 256, 256, 16
    $region17: #{tpu_custom_call.1} parent=1 // pred_fallthru
      _
    // Predicated region
    $region18: #{tpu_custom_call.1} parent=1 // pred_check
      _
    $region19: #{tpu_custom_call.1} parent=1 // pred_check_branch
      %68 = sbr.rel (0) target = $region21
    $region20: #{tpu_custom_call.1} parent=1 // pred_region
      %s70 = ssub.s32 4096, 4096
      %71 = vsyncadd [#allocation9], %s70
      %s72 = sshll.u32 [#allocation10], 4
      %s73 = int_to_ptr.vmem [resolvable:$true] %s72
      %78 = dma.hbm_to_vmem [thread:$0]  %s4, 4096, %s73, [#allocation9], 256, 256, 16
    $region21: #{tpu_custom_call.1} parent=1 // pred_fallthru
      _
    // Predicated region
    $region22: #{tpu_custom_call.1} parent=1 // pred_check
      _
    $region23: #{tpu_custom_call.1} parent=1 // pred_check_branch
      %80 = sbr.rel (0) target = $region25
    $region24: #{tpu_custom_call.1} parent=1 // pred_region
      %s82 = ssub.s32 4096, 4096
      %83 = vsyncadd [#allocation12], %s82
      %s84 = sshll.u32 [#allocation11], 4
      %s85 = int_to_ptr.vmem [resolvable:$true] %s84
      %90 = dma.hbm_to_vmem [thread:$0]  %s5, 4096, %s85, [#allocation12], 128, 128, 8
    $region25: #{tpu_custom_call.1} parent=1 // pred_fallthru
      _
    // Predicated region
    $region26: #{tpu_custom_call.1} parent=1 // pred_check
      _
    $region27: #{tpu_custom_call.1} parent=1 // pred_check_branch
      %92 = sbr.rel (0) target = $region29
    $region28: #{tpu_custom_call.1} parent=1 // pred_region
      _
    $region29: #{tpu_custom_call.1} parent=1 // pred_fallthru
      _
    // Predicated region
    $region30: #{tpu_custom_call.1} parent=1 // pred_check
      _
    $region31: #{tpu_custom_call.1} parent=1 // pred_check_branch
      %94 = sbr.rel (0) target = $region33
    $region32: #{tpu_custom_call.1} parent=1 // pred_region
      _
    $region33: #{tpu_custom_call.1} parent=1 // pred_fallthru
      _
    // Predicated region
    $region34: #{tpu_custom_call.1} parent=1 // pred_check
      _
    $region35: #{tpu_custom_call.1} parent=1 // pred_check_branch
      %96 = sbr.rel (0) target = $region37
    $region36: #{tpu_custom_call.1} parent=1 // pred_region
      _
    $region37: #{tpu_custom_call.1} parent=1 // pred_fallthru
      _
    // Predicated region
    $region38: #{tpu_custom_call.1} parent=1 // pred_check
      _
    $region39: #{tpu_custom_call.1} parent=1 // pred_check_branch
      %98 = sbr.rel (0) target = $region41
    $region40: #{tpu_custom_call.1} parent=1 // pred_region
      _
    $region41: #{tpu_custom_call.1} parent=1 // pred_fallthru
      _
    // Predicated region
    $region42: #{tpu_custom_call.1} parent=1 // pred_check
      _
    $region43: #{tpu_custom_call.1} parent=1 // pred_check_branch
      %100 = sbr.rel (0) target = $region45
    $region44: #{tpu_custom_call.1} parent=1 // pred_region
      _
    $region45: #{tpu_custom_call.1} parent=1 // pred_fallthru
      _
    // Predicated region
    $region46: #{tpu_custom_call.1} parent=1 // pred_check
      _
    $region47: #{tpu_custom_call.1} parent=1 // pred_check_branch
      %102 = sbr.rel (0) target = $region49
    $region48: #{tpu_custom_call.1} parent=1 // pred_region
      %103 = dma.done [#allocation3], 128
    $region49: #{tpu_custom_call.1} parent=1 // pred_fallthru
      _
    // Predicated region
    $region50: #{tpu_custom_call.1} parent=1 // pred_check
      _
    $region51: #{tpu_custom_call.1} parent=1 // pred_check_branch
      %105 = sbr.rel (0) target = $region53
    $region52: #{tpu_custom_call.1} parent=1 // pred_region
      %106 = dma.done [#allocation6], 1280
    $region53: #{tpu_custom_call.1} parent=1 // pred_fallthru
      _
    // Predicated region
    $region54: #{tpu_custom_call.1} parent=1 // pred_check
      _
    $region55: #{tpu_custom_call.1} parent=1 // pred_check_branch
      %108 = sbr.rel (0) target = $region57
    $region56: #{tpu_custom_call.1} parent=1 // pred_region
      %109 = dma.done [#allocation6], 16384
    $region57: #{tpu_custom_call.1} parent=1 // pred_fallthru
      _
    // Predicated region
    $region58: #{tpu_custom_call.1} parent=1 // pred_check
      _
    $region59: #{tpu_custom_call.1} parent=1 // pred_check_branch
      %111 = sbr.rel (0) target = $region61
    $region60: #{tpu_custom_call.1} parent=1 // pred_region
      %112 = dma.done [#allocation9], 8192
    $region61: #{tpu_custom_call.1} parent=1 // pred_fallthru
      _
    // Predicated region
    $region62: #{tpu_custom_call.1} parent=1 // pred_check
      _
    $region63: #{tpu_custom_call.1} parent=1 // pred_check_branch
      %114 = sbr.rel (0) target = $region65
    $region64: #{tpu_custom_call.1} parent=1 // pred_region
      %115 = dma.done [#allocation9], 4096
    $region65: #{tpu_custom_call.1} parent=1 // pred_fallthru
      _
    // Predicated region
    $region66: #{tpu_custom_call.1} parent=1 // pred_check
      _
    $region67: #{tpu_custom_call.1} parent=1 // pred_check_branch
      %117 = sbr.rel (0) target = $region69
    $region68: #{tpu_custom_call.1} parent=1 // pred_region
      %118 = dma.done [#allocation12], 4096
    $region69: #{tpu_custom_call.1} parent=1 // pred_fallthru
      _
    %v119 = vld [vmem:[#allocation2] sm:$0xff]
    %v120 = vld [vmem:[#allocation5] sm:$0xff]
    %v121 = vld [vmem:[#allocation5 + $0x8] sm:$0xff]
    %v122 = vld [vmem:[#allocation5 + $0x10] sm:$0xff]
    %v123 = vld [vmem:[#allocation5 + $0x18] sm:$0xff]
    %v124 = vld [vmem:[#allocation5 + $0x20] sm:$0xff]
    %v125 = vld [vmem:[#allocation5 + $0x28] sm:$0xff]
    %v126 = vld [vmem:[#allocation5 + $0x30] sm:$0xff]
    %v127 = vld [vmem:[#allocation5 + $0x38] sm:$0xff]
    %v128 = vld [vmem:[#allocation5 + $0x40] sm:$0x7f]
    %v129 = vld [vmem:[#allocation5 + $0x48] sm:$0x7f]
    %v130 = vld [vmem:[%s6] sm:$0x3]
    %v132 = vlaneseq
    %v133 = vshrl.u32 %v132, 7
    %v134 = vsub.s32 0, %v133
    %v135 = vrot.slane %v130, %v134
    %v136 = vlaneseq
    %v137 = vshrl.u32 %v136, 7
    %v138 = vsub.s32 1, %v137
    %v139 = vrot.slane %v130, %v138
    %vm142 = vcmask 318464
    %v144 = vsel %vm142, %v119, 0
    %vm146 = vcmask 1046528
    %v148 = vsel %vm146, %v128, 0
    %v151 = vsel %vm146, %v129, 0
    %153 = vmatprep.subr.mxu0 %v121
    %154 = vmatpush1.msra.mxu0 %v120
    %155 = vmatprep.subr.mxu0 %v123
    %156 = vmatpush1.msra.mxu0 %v122
    %157 = vmatprep.subr.mxu0 %v125
    %158 = vmatpush1.msra.mxu0 %v124
    %159 = vmatprep.subr.mxu0 %v127
    %160 = vmatpush1.msra.mxu0 %v126
    %161 = vmatprep.subr.mxu0 %v151
    %162 = vmatpush1.msra.mxu0 %v148
    %163 = vmatprep.subr.mxu0 0.0
    %164 = vmatpush1.msra.mxu0 0.0
    %165 = vmatprep.subr.mxu0 0.0
    %166 = vmatpush1.msra.mxu0 0.0
    %167 = vmatprep.subr.mxu0 0.0
    %168 = vmatpush1.msra.mxu0 0.0
    %169 = vmatprep.subr.mxu0 0.0
    %170 = vmatpush1.msra.mxu0 0.0
    %171 = vmatprep.subr.mxu0 0.0
    %172 = vmatpush1.msra.mxu0 0.0
    %173 = vmatprep.subr.mxu0 0.0
    %174 = vmatpush1.msra.mxu0 0.0
    %175 = vmatprep.subr.mxu0 0.0
    %176 = vmatpush1.msra.mxu0 0.0
    %177 = vmatprep.subr.mxu0 0.0
    %178 = vmatpush1.msra.mxu0 0.0
    %179 = vmatprep.subr.mxu0 0.0
    %180 = vmatpush1.msra.mxu0 0.0
    %181 = vmatprep.subr.mxu0 0.0
    %182 = vmatpush1.msra.mxu0 0.0
    %183 = vmatprep.subr.mxu0 0.0
    %184 = vmatpush1.msra.mxu0 0.0
    %185 = vmatprep.subr.mxu0 0.0
    %186 = vmatpush1.msra.mxu0 0.0
    %187 = vmatprep.subr.mxu0 0.0
    %188 = vmatpush1.msra.mxu0 0.0
    %189 = vmatprep.subr.mxu0 0.0
    %190 = vmatpush1.msra.mxu0 0.0
    %191 = vmatprep.subr.mxu0 0.0
    %192 = vmatpush1.msra.mxu0 0.0
    %193 = vmatprep.subr.mxu0 0.0
    %194 = vmatpush1.msra.mxu0 0.0
    %195 = vmatprep.subr.mxu0 0.0
    %196 = vmatpush1.msra.mxu0 0.0
    %197 = vmatprep.subr.mxu0 0.0
    %198 = vmatpush1.msra.mxu0 0.0
    %199 = vmatprep.subr.mxu0 0.0
    %200 = vmatpush1.msra.mxu0 0.0
    %201 = vmatprep.subr.mxu0 0.0
    %202 = vmatpush1.msra.mxu0 0.0
    %203 = vmatprep.subr.mxu0 0.0
    %204 = vmatpush1.msra.mxu0 0.0
    %205 = vmatprep.subr.mxu0 0.0
    %206 = vmatpush1.msra.mxu0 0.0
    %207 = vmatprep.subr.mxu0 0.0
    %208 = vmatpush1.msra.mxu0 0.0
    %209 = vmatprep.subr.mxu0 0.0
    %210 = vmatpush1.msra.mxu0 0.0
    %211 = vmatprep.subr.mxu0 0.0
    %212 = vmatpush1.msra.mxu0 0.0
    %213 = vmatprep.subr.mxu0 0.0
    %214 = vmatpush1.msra.mxu0 0.0
    %215 = vmatprep.subr.mxu0 0.0
    %216 = vmatpush1.msra.mxu0 0.0
    %217 = vmatprep.mubr.f32.mxu0 0.0
    %218 = vmatmul.mubr.f32.gmra.mrb[0].mxu0 %v144
    %v219 = vpop.f32.mrb[0].mxu0
    %v220 = vadd.f32 %v135, %v219
    %v221 = vpop.f32.mrb[0].mxu0
    %v222 = vadd.f32 %v139, %v221
    %223 = vdwg.mxu0
    %v224 = vmax.f32 %v220, 0.0
    %v225 = vmax.f32 %v222, 0.0
    %v226 = vld [vmem:[#allocation7] sm:$0xff]
    %v227 = vld [vmem:[#allocation7 + $0x8] sm:$0xff]
    %v228 = vld [vmem:[#allocation7 + $0x10] sm:$0xff]
    %v229 = vld [vmem:[#allocation7 + $0x18] sm:$0xff]
    %v230 = vld [vmem:[#allocation7 + $0x20] sm:$0xff]
    %v231 = vld [vmem:[#allocation7 + $0x28] sm:$0xff]
    %v232 = vld [vmem:[#allocation7 + $0x30] sm:$0xff]
    %v233 = vld [vmem:[#allocation7 + $0x38] sm:$0xff]
    %v234 = vld [vmem:[#allocation7 + $0x40] sm:$0xff]
    %v235 = vld [vmem:[#allocation7 + $0x48] sm:$0xff]
    %v236 = vld [vmem:[#allocation7 + $0x50] sm:$0xff]
    %v237 = vld [vmem:[#allocation7 + $0x58] sm:$0xff]
    %v238 = vld [vmem:[#allocation7 + $0x60] sm:$0xff]
    %v239 = vld [vmem:[#allocation7 + $0x68] sm:$0xff]
    %v240 = vld [vmem:[#allocation7 + $0x70] sm:$0xff]
    %v241 = vld [vmem:[#allocation7 + $0x78] sm:$0xff]
    %v242 = vld [vmem:[#allocation7 + $0x80] sm:$0xff]
    %v243 = vld [vmem:[#allocation7 + $0x88] sm:$0xff]
    %v244 = vld [vmem:[#allocation7 + $0x90] sm:$0xff]
    %v245 = vld [vmem:[#allocation7 + $0x98] sm:$0xff]
    %v246 = vld [vmem:[#allocation7 + $0xa0] sm:$0xff]
    %v247 = vld [vmem:[#allocation7 + $0xa8] sm:$0xff]
    %v248 = vld [vmem:[#allocation7 + $0xb0] sm:$0xff]
    %v249 = vld [vmem:[#allocation7 + $0xb8] sm:$0xff]
    %v250 = vld [vmem:[#allocation7 + $0xc0] sm:$0xff]
    %v251 = vld [vmem:[#allocation7 + $0xc8] sm:$0xff]
    %v252 = vld [vmem:[#allocation7 + $0xd0] sm:$0xff]
    %v253 = vld [vmem:[#allocation7 + $0xd8] sm:$0xff]
    %v254 = vld [vmem:[#allocation7 + $0xe0] sm:$0xff]
    %v255 = vld [vmem:[#allocation7 + $0xe8] sm:$0xff]
    %v256 = vld [vmem:[#allocation7 + $0xf0] sm:$0xff]
    %v257 = vld [vmem:[#allocation7 + $0xf8] sm:$0xff]
    %v258 = vld [vmem:[#allocation7 + $0x100] sm:$0xff]
    %v259 = vld [vmem:[#allocation7 + $0x108] sm:$0xff]
    %v260 = vld [vmem:[#allocation7 + $0x110] sm:$0xff]
    %v261 = vld [vmem:[#allocation7 + $0x118] sm:$0xff]
    %v262 = vld [vmem:[#allocation7 + $0x120] sm:$0xff]
    %v263 = vld [vmem:[#allocation7 + $0x128] sm:$0xff]
    %v264 = vld [vmem:[#allocation7 + $0x130] sm:$0xff]
    %v265 = vld [vmem:[#allocation7 + $0x138] sm:$0xff]
    %v266 = vld [vmem:[#allocation7 + $0x140] sm:$0xff]
    %v267 = vld [vmem:[#allocation7 + $0x148] sm:$0xff]
    %v268 = vld [vmem:[#allocation7 + $0x150] sm:$0xff]
    %v269 = vld [vmem:[#allocation7 + $0x158] sm:$0xff]
    %v270 = vld [vmem:[#allocation7 + $0x160] sm:$0xff]
    %v271 = vld [vmem:[#allocation7 + $0x168] sm:$0xff]
    %v272 = vld [vmem:[#allocation7 + $0x170] sm:$0xff]
    %v273 = vld [vmem:[#allocation7 + $0x178] sm:$0xff]
    %v274 = vld [vmem:[#allocation7 + $0x180] sm:$0xff]
    %v275 = vld [vmem:[#allocation7 + $0x188] sm:$0xff]
    %v276 = vld [vmem:[#allocation7 + $0x190] sm:$0xff]
    %v277 = vld [vmem:[#allocation7 + $0x198] sm:$0xff]
    %v278 = vld [vmem:[#allocation7 + $0x1a0] sm:$0xff]
    %v279 = vld [vmem:[#allocation7 + $0x1a8] sm:$0xff]
    %v280 = vld [vmem:[#allocation7 + $0x1b0] sm:$0xff]
    %v281 = vld [vmem:[#allocation7 + $0x1b8] sm:$0xff]
    %v282 = vld [vmem:[#allocation7 + $0x1c0] sm:$0xff]
    %v283 = vld [vmem:[#allocation7 + $0x1c8] sm:$0xff]
    %v284 = vld [vmem:[#allocation7 + $0x1d0] sm:$0xff]
    %v285 = vld [vmem:[#allocation7 + $0x1d8] sm:$0xff]
    %v286 = vld [vmem:[#allocation7 + $0x1e0] sm:$0xff]
    %v287 = vld [vmem:[#allocation7 + $0x1e8] sm:$0xff]
    %v288 = vld [vmem:[#allocation7 + $0x1f0] sm:$0xff]
    %v289 = vld [vmem:[#allocation7 + $0x1f8] sm:$0xff]
    %v290 = vld [vmem:[#allocation7 + $0x200] sm:$0xff]
    %v291 = vld [vmem:[#allocation7 + $0x208] sm:$0xff]
    %v292 = vld [vmem:[#allocation7 + $0x210] sm:$0xff]
    %v293 = vld [vmem:[#allocation7 + $0x218] sm:$0xff]
    %v294 = vld [vmem:[#allocation7 + $0x220] sm:$0xff]
    %v295 = vld [vmem:[#allocation7 + $0x228] sm:$0xff]
    %v296 = vld [vmem:[#allocation7 + $0x230] sm:$0xff]
    %v297 = vld [vmem:[#allocation7 + $0x238] sm:$0xff]
    %v298 = vld [vmem:[#allocation7 + $0x240] sm:$0xff]
    %v299 = vld [vmem:[#allocation7 + $0x248] sm:$0xff]
    %v300 = vld [vmem:[#allocation7 + $0x250] sm:$0xff]
    %v301 = vld [vmem:[#allocation7 + $0x258] sm:$0xff]
    %v302 = vld [vmem:[#allocation7 + $0x260] sm:$0xff]
    %v303 = vld [vmem:[#allocation7 + $0x268] sm:$0xff]
    %v304 = vld [vmem:[#allocation7 + $0x270] sm:$0xff]
    %v305 = vld [vmem:[#allocation7 + $0x278] sm:$0xff]
    %v306 = vld [vmem:[#allocation7 + $0x280] sm:$0xff]
    %v307 = vld [vmem:[#allocation7 + $0x288] sm:$0xff]
    %v308 = vld [vmem:[#allocation7 + $0x290] sm:$0xff]
    %v309 = vld [vmem:[#allocation7 + $0x298] sm:$0xff]
    %v310 = vld [vmem:[#allocation7 + $0x2a0] sm:$0xff]
    %v311 = vld [vmem:[#allocation7 + $0x2a8] sm:$0xff]
    %v312 = vld [vmem:[#allocation7 + $0x2b0] sm:$0xff]
    %v313 = vld [vmem:[#allocation7 + $0x2b8] sm:$0xff]
    %v314 = vld [vmem:[#allocation7 + $0x2c0] sm:$0xff]
    %v315 = vld [vmem:[#allocation7 + $0x2c8] sm:$0xff]
    %v316 = vld [vmem:[#allocation7 + $0x2d0] sm:$0xff]
    %v317 = vld [vmem:[#allocation7 + $0x2d8] sm:$0xff]
    %v318 = vld [vmem:[#allocation7 + $0x2e0] sm:$0xff]
    %v319 = vld [vmem:[#allocation7 + $0x2e8] sm:$0xff]
    %v320 = vld [vmem:[#allocation7 + $0x2f0] sm:$0xff]
    %v321 = vld [vmem:[#allocation7 + $0x2f8] sm:$0xff]
    %v322 = vld [vmem:[#allocation7 + $0x300] sm:$0xff]
    %v323 = vld [vmem:[#allocation7 + $0x308] sm:$0xff]
    %v324 = vld [vmem:[#allocation7 + $0x310] sm:$0xff]
    %v325 = vld [vmem:[#allocation7 + $0x318] sm:$0xff]
    %v326 = vld [vmem:[#allocation7 + $0x320] sm:$0xff]
    %v327 = vld [vmem:[#allocation7 + $0x328] sm:$0xff]
    %v328 = vld [vmem:[#allocation7 + $0x330] sm:$0xff]
    %v329 = vld [vmem:[#allocation7 + $0x338] sm:$0xff]
    %v330 = vld [vmem:[#allocation7 + $0x340] sm:$0xff]
    %v331 = vld [vmem:[#allocation7 + $0x348] sm:$0xff]
    %v332 = vld [vmem:[#allocation7 + $0x350] sm:$0xff]
    %v333 = vld [vmem:[#allocation7 + $0x358] sm:$0xff]
    %v334 = vld [vmem:[#allocation7 + $0x360] sm:$0xff]
    %v335 = vld [vmem:[#allocation7 + $0x368] sm:$0xff]
    %v336 = vld [vmem:[#allocation7 + $0x370] sm:$0xff]
    %v337 = vld [vmem:[#allocation7 + $0x378] sm:$0xff]
    %v338 = vld [vmem:[#allocation7 + $0x380] sm:$0xff]
    %v339 = vld [vmem:[#allocation7 + $0x388] sm:$0xff]
    %v340 = vld [vmem:[#allocation7 + $0x390] sm:$0xff]
    %v341 = vld [vmem:[#allocation7 + $0x398] sm:$0xff]
    %v342 = vld [vmem:[#allocation7 + $0x3a0] sm:$0xff]
    %v343 = vld [vmem:[#allocation7 + $0x3a8] sm:$0xff]
    %v344 = vld [vmem:[#allocation7 + $0x3b0] sm:$0xff]
    %v345 = vld [vmem:[#allocation7 + $0x3b8] sm:$0xff]
    %v346 = vld [vmem:[#allocation7 + $0x3c0] sm:$0xff]
    %v347 = vld [vmem:[#allocation7 + $0x3c8] sm:$0xff]
    %v348 = vld [vmem:[#allocation7 + $0x3d0] sm:$0xff]
    %v349 = vld [vmem:[#allocation7 + $0x3d8] sm:$0xff]
    %v350 = vld [vmem:[#allocation7 + $0x3e0] sm:$0xff]
    %v351 = vld [vmem:[#allocation7 + $0x3e8] sm:$0xff]
    %v352 = vld [vmem:[#allocation7 + $0x3f0] sm:$0xff]
    %v353 = vld [vmem:[#allocation7 + $0x3f8] sm:$0xff]
    %v354 = vld [vmem:[%s7] sm:$0xf]
    %v356 = vlaneseq
    %v357 = vshrl.u32 %v356, 7
    %v358 = vsub.s32 0, %v357
    %v359 = vrot.slane %v354, %v358
    %v360 = vlaneseq
    %v361 = vshrl.u32 %v360, 7
    %v362 = vsub.s32 1, %v361
    %v363 = vrot.slane %v354, %v362
    %v364 = vlaneseq
    %v365 = vshrl.u32 %v364, 7
    %v366 = vsub.s32 2, %v365
    %v367 = vrot.slane %v354, %v366
    %v368 = vlaneseq
    %v369 = vshrl.u32 %v368, 7
    %v370 = vsub.s32 3, %v369
    %v371 = vrot.slane %v354, %v370
    %376 = vmatprep.subr.mxu0 %v227
    %377 = vmatpush1.msra.mxu0 %v226
    %378 = vmatprep.subr.mxu0 %v231
    %379 = vmatpush1.msra.mxu0 %v230
    %380 = vmatprep.subr.mxu0 %v235
    %381 = vmatpush1.msra.mxu0 %v234
    %382 = vmatprep.subr.mxu0 %v239
    %383 = vmatpush1.msra.mxu0 %v238
    %384 = vmatprep.subr.mxu0 %v243
    %385 = vmatpush1.msra.mxu0 %v242
    %386 = vmatprep.subr.mxu0 %v247
    %387 = vmatpush1.msra.mxu0 %v246
    %388 = vmatprep.subr.mxu0 %v251
    %389 = vmatpush1.msra.mxu0 %v250
    %390 = vmatprep.subr.mxu0 %v255
    %391 = vmatpush1.msra.mxu0 %v254
    %392 = vmatprep.subr.mxu0 %v259
    %393 = vmatpush1.msra.mxu0 %v258
    %394 = vmatprep.subr.mxu0 %v263
    %395 = vmatpush1.msra.mxu0 %v262
    %396 = vmatprep.subr.mxu0 %v267
    %397 = vmatpush1.msra.mxu0 %v266
    %398 = vmatprep.subr.mxu0 %v271
    %399 = vmatpush1.msra.mxu0 %v270
    %400 = vmatprep.subr.mxu0 %v275
    %401 = vmatpush1.msra.mxu0 %v274
    %402 = vmatprep.subr.mxu0 %v279
    %403 = vmatpush1.msra.mxu0 %v278
    %404 = vmatprep.subr.mxu0 %v283
    %405 = vmatpush1.msra.mxu0 %v282
    %406 = vmatprep.subr.mxu0 %v287
    %407 = vmatpush1.msra.mxu0 %v286
    %408 = vmatprep.subr.mxu0 %v291
    %409 = vmatpush1.msra.mxu0 %v290
    %410 = vmatprep.subr.mxu0 %v295
    %411 = vmatpush1.msra.mxu0 %v294
    %412 = vmatprep.subr.mxu0 %v299
    %413 = vmatpush1.msra.mxu0 %v298
    %414 = vmatprep.subr.mxu0 %v303
    %415 = vmatpush1.msra.mxu0 %v302
    %416 = vmatprep.subr.mxu0 %v307
    %417 = vmatpush1.msra.mxu0 %v306
    %418 = vmatprep.subr.mxu0 %v311
    %419 = vmatpush1.msra.mxu0 %v310
    %420 = vmatprep.subr.mxu0 %v315
    %421 = vmatpush1.msra.mxu0 %v314
    %422 = vmatprep.subr.mxu0 %v319
    %423 = vmatpush1.msra.mxu0 %v318
    %424 = vmatprep.subr.mxu0 %v323
    %425 = vmatpush1.msra.mxu0 %v322
    %426 = vmatprep.subr.mxu0 %v327
    %427 = vmatpush1.msra.mxu0 %v326
    %428 = vmatprep.subr.mxu0 %v331
    %429 = vmatpush1.msra.mxu0 %v330
    %430 = vmatprep.subr.mxu0 %v335
    %431 = vmatpush1.msra.mxu0 %v334
    %432 = vmatprep.subr.mxu0 %v339
    %433 = vmatpush1.msra.mxu0 %v338
    %434 = vmatprep.subr.mxu0 %v343
    %435 = vmatpush1.msra.mxu0 %v342
    %436 = vmatprep.subr.mxu0 %v347
    %437 = vmatpush1.msra.mxu0 %v346
    %438 = vmatprep.subr.mxu0 %v351
    %439 = vmatpush1.msra.mxu0 %v350
    %440 = vmatprep.mubr.f32.mxu0 %v225
    %441 = vmatmul.mubr.f32.gmra.mrb[0].mxu0 %v224
    %v442 = vpop.f32.mrb[0].mxu0
    %v443 = vadd.f32 %v359, %v442
    %v444 = vpop.f32.mrb[0].mxu0
    %v445 = vadd.f32 %v363, %v444
    %446 = vdwg.mxu0
    %447 = vmatprep.subr.mxu0 %v229
    %448 = vmatpush1.msra.mxu0 %v228
    %449 = vmatprep.subr.mxu0 %v233
    %450 = vmatpush1.msra.mxu0 %v232
    %451 = vmatprep.subr.mxu0 %v237
    %452 = vmatpush1.msra.mxu0 %v236
    %453 = vmatprep.subr.mxu0 %v241
    %454 = vmatpush1.msra.mxu0 %v240
    %455 = vmatprep.subr.mxu0 %v245
    %456 = vmatpush1.msra.mxu0 %v244
    %457 = vmatprep.subr.mxu0 %v249
    %458 = vmatpush1.msra.mxu0 %v248
    %459 = vmatprep.subr.mxu0 %v253
    %460 = vmatpush1.msra.mxu0 %v252
    %461 = vmatprep.subr.mxu0 %v257
    %462 = vmatpush1.msra.mxu0 %v256
    %463 = vmatprep.subr.mxu0 %v261
    %464 = vmatpush1.msra.mxu0 %v260
    %465 = vmatprep.subr.mxu0 %v265
    %466 = vmatpush1.msra.mxu0 %v264
    %467 = vmatprep.subr.mxu0 %v269
    %468 = vmatpush1.msra.mxu0 %v268
    %469 = vmatprep.subr.mxu0 %v273
    %470 = vmatpush1.msra.mxu0 %v272
    %471 = vmatprep.subr.mxu0 %v277
    %472 = vmatpush1.msra.mxu0 %v276
    %473 = vmatprep.subr.mxu0 %v281
    %474 = vmatpush1.msra.mxu0 %v280
    %475 = vmatprep.subr.mxu0 %v285
    %476 = vmatpush1.msra.mxu0 %v284
    %477 = vmatprep.subr.mxu0 %v289
    %478 = vmatpush1.msra.mxu0 %v288
    %479 = vmatprep.subr.mxu0 %v293
    %480 = vmatpush1.msra.mxu0 %v292
    %481 = vmatprep.subr.mxu0 %v297
    %482 = vmatpush1.msra.mxu0 %v296
    %483 = vmatprep.subr.mxu0 %v301
    %484 = vmatpush1.msra.mxu0 %v300
    %485 = vmatprep.subr.mxu0 %v305
    %486 = vmatpush1.msra.mxu0 %v304
    %487 = vmatprep.subr.mxu0 %v309
    %488 = vmatpush1.msra.mxu0 %v308
    %489 = vmatprep.subr.mxu0 %v313
    %490 = vmatpush1.msra.mxu0 %v312
    %491 = vmatprep.subr.mxu0 %v317
    %492 = vmatpush1.msra.mxu0 %v316
    %493 = vmatprep.subr.mxu0 %v321
    %494 = vmatpush1.msra.mxu0 %v320
    %495 = vmatprep.subr.mxu0 %v325
    %496 = vmatpush1.msra.mxu0 %v324
    %497 = vmatprep.subr.mxu0 %v329
    %498 = vmatpush1.msra.mxu0 %v328
    %499 = vmatprep.subr.mxu0 %v333
    %500 = vmatpush1.msra.mxu0 %v332
    %501 = vmatprep.subr.mxu0 %v337
    %502 = vmatpush1.msra.mxu0 %v336
    %503 = vmatprep.subr.mxu0 %v341
    %504 = vmatpush1.msra.mxu0 %v340
    %505 = vmatprep.subr.mxu0 %v345
    %506 = vmatpush1.msra.mxu0 %v344
    %507 = vmatprep.subr.mxu0 %v349
    %508 = vmatpush1.msra.mxu0 %v348
    %509 = vmatprep.subr.mxu0 %v353
    %510 = vmatpush1.msra.mxu0 %v352
    %511 = vmatprep.mubr.f32.mxu0 %v225
    %512 = vmatmul.mubr.f32.gmra.mrb[0].mxu0 %v224
    %v513 = vpop.f32.mrb[0].mxu0
    %v514 = vadd.f32 %v367, %v513
    %v515 = vpop.f32.mrb[0].mxu0
    %v516 = vadd.f32 %v371, %v515
    %517 = vdwg.mxu0
    %v518 = vmax.f32 %v443, 0.0
    %v519 = vmax.f32 %v445, 0.0
    %v520 = vmax.f32 %v514, 0.0
    %v521 = vmax.f32 %v516, 0.0
    %v522 = vmax.f32 %v518, %v520
    %v523 = vmax.f32 %v519, %v521
    %v524 = vld [vmem:[#allocation8] sm:$0xff]
    %v525 = vld [vmem:[#allocation8 + $0x8] sm:$0xff]
    %v526 = vld [vmem:[#allocation8 + $0x10] sm:$0xff]
    %v527 = vld [vmem:[#allocation8 + $0x18] sm:$0xff]
    %v528 = vld [vmem:[#allocation8 + $0x20] sm:$0xff]
    %v529 = vld [vmem:[#allocation8 + $0x28] sm:$0xff]
    %v530 = vld [vmem:[#allocation8 + $0x30] sm:$0xff]
    %v531 = vld [vmem:[#allocation8 + $0x38] sm:$0xff]
    %v532 = vld [vmem:[#allocation8 + $0x40] sm:$0xff]
    %v533 = vld [vmem:[#allocation8 + $0x48] sm:$0xff]
    %v534 = vld [vmem:[#allocation8 + $0x50] sm:$0xff]
    %v535 = vld [vmem:[#allocation8 + $0x58] sm:$0xff]
    %v536 = vld [vmem:[#allocation8 + $0x60] sm:$0xff]
    %v537 = vld [vmem:[#allocation8 + $0x68] sm:$0xff]
    %v538 = vld [vmem:[#allocation8 + $0x70] sm:$0xff]
    %v539 = vld [vmem:[#allocation8 + $0x78] sm:$0xff]
    %v540 = vld [vmem:[#allocation8 + $0x80] sm:$0xff]
    %v541 = vld [vmem:[#allocation8 + $0x88] sm:$0xff]
    %v542 = vld [vmem:[#allocation8 + $0x90] sm:$0xff]
    %v543 = vld [vmem:[#allocation8 + $0x98] sm:$0xff]
    %v544 = vld [vmem:[#allocation8 + $0xa0] sm:$0xff]
    %v545 = vld [vmem:[#allocation8 + $0xa8] sm:$0xff]
    %v546 = vld [vmem:[#allocation8 + $0xb0] sm:$0xff]
    %v547 = vld [vmem:[#allocation8 + $0xb8] sm:$0xff]
    %v548 = vld [vmem:[#allocation8 + $0xc0] sm:$0xff]
    %v549 = vld [vmem:[#allocation8 + $0xc8] sm:$0xff]
    %v550 = vld [vmem:[#allocation8 + $0xd0] sm:$0xff]
    %v551 = vld [vmem:[#allocation8 + $0xd8] sm:$0xff]
    %v552 = vld [vmem:[#allocation8 + $0xe0] sm:$0xff]
    %v553 = vld [vmem:[#allocation8 + $0xe8] sm:$0xff]
    %v554 = vld [vmem:[#allocation8 + $0xf0] sm:$0xff]
    %v555 = vld [vmem:[#allocation8 + $0xf8] sm:$0xff]
    %v556 = vld [vmem:[#allocation8 + $0x100] sm:$0xff]
    %v557 = vld [vmem:[#allocation8 + $0x108] sm:$0xff]
    %v558 = vld [vmem:[#allocation8 + $0x110] sm:$0xff]
    %v559 = vld [vmem:[#allocation8 + $0x118] sm:$0xff]
    %v560 = vld [vmem:[#allocation8 + $0x120] sm:$0xff]
    %v561 = vld [vmem:[#allocation8 + $0x128] sm:$0xff]
    %v562 = vld [vmem:[#allocation8 + $0x130] sm:$0xff]
    %v563 = vld [vmem:[#allocation8 + $0x138] sm:$0xff]
    %v564 = vld [vmem:[#allocation8 + $0x140] sm:$0xff]
    %v565 = vld [vmem:[#allocation8 + $0x148] sm:$0xff]
    %v566 = vld [vmem:[#allocation8 + $0x150] sm:$0xff]
    %v567 = vld [vmem:[#allocation8 + $0x158] sm:$0xff]
    %v568 = vld [vmem:[#allocation8 + $0x160] sm:$0xff]
    %v569 = vld [vmem:[#allocation8 + $0x168] sm:$0xff]
    %v570 = vld [vmem:[#allocation8 + $0x170] sm:$0xff]
    %v571 = vld [vmem:[#allocation8 + $0x178] sm:$0xff]
    %v572 = vld [vmem:[#allocation8 + $0x180] sm:$0xff]
    %v573 = vld [vmem:[#allocation8 + $0x188] sm:$0xff]
    %v574 = vld [vmem:[#allocation8 + $0x190] sm:$0xff]
    %v575 = vld [vmem:[#allocation8 + $0x198] sm:$0xff]
    %v576 = vld [vmem:[#allocation8 + $0x1a0] sm:$0xff]
    %v577 = vld [vmem:[#allocation8 + $0x1a8] sm:$0xff]
    %v578 = vld [vmem:[#allocation8 + $0x1b0] sm:$0xff]
    %v579 = vld [vmem:[#allocation8 + $0x1b8] sm:$0xff]
    %v580 = vld [vmem:[#allocation8 + $0x1c0] sm:$0xff]
    %v581 = vld [vmem:[#allocation8 + $0x1c8] sm:$0xff]
    %v582 = vld [vmem:[#allocation8 + $0x1d0] sm:$0xff]
    %v583 = vld [vmem:[#allocation8 + $0x1d8] sm:$0xff]
    %v584 = vld [vmem:[#allocation8 + $0x1e0] sm:$0xff]
    %v585 = vld [vmem:[#allocation8 + $0x1e8] sm:$0xff]
    %v586 = vld [vmem:[#allocation8 + $0x1f0] sm:$0xff]
    %v587 = vld [vmem:[#allocation8 + $0x1f8] sm:$0xff]
    %v588 = vld [vmem:[%s8] sm:$0x3]
    %v590 = vlaneseq
    %v591 = vshrl.u32 %v590, 7
    %v592 = vsub.s32 0, %v591
    %v593 = vrot.slane %v588, %v592
    %v594 = vlaneseq
    %v595 = vshrl.u32 %v594, 7
    %v596 = vsub.s32 1, %v595
    %v597 = vrot.slane %v588, %v596
    %600 = vmatprep.subr.mxu0 %v525
    %601 = vmatpush1.msra.mxu0 %v524
    %602 = vmatprep.subr.mxu0 %v527
    %603 = vmatpush1.msra.mxu0 %v526
    %604 = vmatprep.subr.mxu0 %v529
    %605 = vmatpush1.msra.mxu0 %v528
    %606 = vmatprep.subr.mxu0 %v531
    %607 = vmatpush1.msra.mxu0 %v530
    %608 = vmatprep.subr.mxu0 %v533
    %609 = vmatpush1.msra.mxu0 %v532
    %610 = vmatprep.subr.mxu0 %v535
    %611 = vmatpush1.msra.mxu0 %v534
    %612 = vmatprep.subr.mxu0 %v537
    %613 = vmatpush1.msra.mxu0 %v536
    %614 = vmatprep.subr.mxu0 %v539
    %615 = vmatpush1.msra.mxu0 %v538
    %616 = vmatprep.subr.mxu0 %v541
    %617 = vmatpush1.msra.mxu0 %v540
    %618 = vmatprep.subr.mxu0 %v543
    %619 = vmatpush1.msra.mxu0 %v542
    %620 = vmatprep.subr.mxu0 %v545
    %621 = vmatpush1.msra.mxu0 %v544
    %622 = vmatprep.subr.mxu0 %v547
    %623 = vmatpush1.msra.mxu0 %v546
    %624 = vmatprep.subr.mxu0 %v549
    %625 = vmatpush1.msra.mxu0 %v548
    %626 = vmatprep.subr.mxu0 %v551
    %627 = vmatpush1.msra.mxu0 %v550
    %628 = vmatprep.subr.mxu0 %v553
    %629 = vmatpush1.msra.mxu0 %v552
    %630 = vmatprep.subr.mxu0 %v555
    %631 = vmatpush1.msra.mxu0 %v554
    %632 = vmatprep.subr.mxu0 %v557
    %633 = vmatpush1.msra.mxu0 %v556
    %634 = vmatprep.subr.mxu0 %v559
    %635 = vmatpush1.msra.mxu0 %v558
    %636 = vmatprep.subr.mxu0 %v561
    %637 = vmatpush1.msra.mxu0 %v560
    %638 = vmatprep.subr.mxu0 %v563
    %639 = vmatpush1.msra.mxu0 %v562
    %640 = vmatprep.subr.mxu0 %v565
    %641 = vmatpush1.msra.mxu0 %v564
    %642 = vmatprep.subr.mxu0 %v567
    %643 = vmatpush1.msra.mxu0 %v566
    %644 = vmatprep.subr.mxu0 %v569
    %645 = vmatpush1.msra.mxu0 %v568
    %646 = vmatprep.subr.mxu0 %v571
    %647 = vmatpush1.msra.mxu0 %v570
    %648 = vmatprep.subr.mxu0 %v573
    %649 = vmatpush1.msra.mxu0 %v572
    %650 = vmatprep.subr.mxu0 %v575
    %651 = vmatpush1.msra.mxu0 %v574
    %652 = vmatprep.subr.mxu0 %v577
    %653 = vmatpush1.msra.mxu0 %v576
    %654 = vmatprep.subr.mxu0 %v579
    %655 = vmatpush1.msra.mxu0 %v578
    %656 = vmatprep.subr.mxu0 %v581
    %657 = vmatpush1.msra.mxu0 %v580
    %658 = vmatprep.subr.mxu0 %v583
    %659 = vmatpush1.msra.mxu0 %v582
    %660 = vmatprep.subr.mxu0 %v585
    %661 = vmatpush1.msra.mxu0 %v584
    %662 = vmatprep.subr.mxu0 %v587
    %663 = vmatpush1.msra.mxu0 %v586
    %664 = vmatprep.mubr.f32.mxu0 %v523
    %665 = vmatmul.mubr.f32.gmra.mrb[0].mxu0 %v522
    %v666 = vpop.f32.mrb[0].mxu0
    %v667 = vadd.f32 %v593, %v666
    %v668 = vpop.f32.mrb[0].mxu0
    %v669 = vadd.f32 %v597, %v668
    %670 = vdwg.mxu0
    %v671 = vmax.f32 %v667, 0.0
    %v672 = vmax.f32 %v669, 0.0
    %v673 = vmax.f32 %v671, %v672
    %v674 = vld [vmem:[#allocation10] sm:$0xff]
    %v675 = vld [vmem:[#allocation10 + $0x8] sm:$0xff]
    %v676 = vld [vmem:[#allocation10 + $0x10] sm:$0xff]
    %v677 = vld [vmem:[#allocation10 + $0x18] sm:$0xff]
    %v678 = vld [vmem:[#allocation10 + $0x20] sm:$0xff]
    %v679 = vld [vmem:[#allocation10 + $0x28] sm:$0xff]
    %v680 = vld [vmem:[#allocation10 + $0x30] sm:$0xff]
    %v681 = vld [vmem:[#allocation10 + $0x38] sm:$0xff]
    %v682 = vld [vmem:[#allocation10 + $0x40] sm:$0xff]
    %v683 = vld [vmem:[#allocation10 + $0x48] sm:$0xff]
    %v684 = vld [vmem:[#allocation10 + $0x50] sm:$0xff]
    %v685 = vld [vmem:[#allocation10 + $0x58] sm:$0xff]
    %v686 = vld [vmem:[#allocation10 + $0x60] sm:$0xff]
    %v687 = vld [vmem:[#allocation10 + $0x68] sm:$0xff]
    %v688 = vld [vmem:[#allocation10 + $0x70] sm:$0xff]
    %v689 = vld [vmem:[#allocation10 + $0x78] sm:$0xff]
    %v690 = vld [vmem:[#allocation10 + $0x80] sm:$0xff]
    %v691 = vld [vmem:[#allocation10 + $0x88] sm:$0xff]
    %v692 = vld [vmem:[#allocation10 + $0x90] sm:$0xff]
    %v693 = vld [vmem:[#allocation10 + $0x98] sm:$0xff]
    %v694 = vld [vmem:[#allocation10 + $0xa0] sm:$0xff]
    %v695 = vld [vmem:[#allocation10 + $0xa8] sm:$0xff]
    %v696 = vld [vmem:[#allocation10 + $0xb0] sm:$0xff]
    %v697 = vld [vmem:[#allocation10 + $0xb8] sm:$0xff]
    %v698 = vld [vmem:[#allocation10 + $0xc0] sm:$0xff]
    %v699 = vld [vmem:[#allocation10 + $0xc8] sm:$0xff]
    %v700 = vld [vmem:[#allocation10 + $0xd0] sm:$0xff]
    %v701 = vld [vmem:[#allocation10 + $0xd8] sm:$0xff]
    %v702 = vld [vmem:[#allocation10 + $0xe0] sm:$0xff]
    %v703 = vld [vmem:[#allocation10 + $0xe8] sm:$0xff]
    %v704 = vld [vmem:[#allocation10 + $0xf0] sm:$0xff]
    %v705 = vld [vmem:[#allocation10 + $0xf8] sm:$0xff]
    %v706 = vld [vmem:[%s9] sm:$0x3]
    %v708 = vlaneseq
    %v709 = vshrl.u32 %v708, 7
    %v710 = vsub.s32 0, %v709
    %v711 = vrot.slane %v706, %v710
    %v712 = vlaneseq
    %v713 = vshrl.u32 %v712, 7
    %v714 = vsub.s32 1, %v713
    %v715 = vrot.slane %v706, %v714
    %718 = vmatprep.subr.mxu0 %v675
    %719 = vmatpush1.msra.mxu0 %v674
    %720 = vmatprep.subr.mxu0 %v677
    %721 = vmatpush1.msra.mxu0 %v676
    %722 = vmatprep.subr.mxu0 %v679
    %723 = vmatpush1.msra.mxu0 %v678
    %724 = vmatprep.subr.mxu0 %v681
    %725 = vmatpush1.msra.mxu0 %v680
    %726 = vmatprep.subr.mxu0 %v683
    %727 = vmatpush1.msra.mxu0 %v682
    %728 = vmatprep.subr.mxu0 %v685
    %729 = vmatpush1.msra.mxu0 %v684
    %730 = vmatprep.subr.mxu0 %v687
    %731 = vmatpush1.msra.mxu0 %v686
    %732 = vmatprep.subr.mxu0 %v689
    %733 = vmatpush1.msra.mxu0 %v688
    %734 = vmatprep.subr.mxu0 %v691
    %735 = vmatpush1.msra.mxu0 %v690
    %736 = vmatprep.subr.mxu0 %v693
    %737 = vmatpush1.msra.mxu0 %v692
    %738 = vmatprep.subr.mxu0 %v695
    %739 = vmatpush1.msra.mxu0 %v694
    %740 = vmatprep.subr.mxu0 %v697
    %741 = vmatpush1.msra.mxu0 %v696
    %742 = vmatprep.subr.mxu0 %v699
    %743 = vmatpush1.msra.mxu0 %v698
    %744 = vmatprep.subr.mxu0 %v701
    %745 = vmatpush1.msra.mxu0 %v700
    %746 = vmatprep.subr.mxu0 %v703
    %747 = vmatpush1.msra.mxu0 %v702
    %748 = vmatprep.subr.mxu0 %v705
    %749 = vmatpush1.msra.mxu0 %v704
    %750 = vmatprep.subr.mxu0 0.0
    %751 = vmatpush1.msra.mxu0 0.0
    %752 = vmatprep.subr.mxu0 0.0
    %753 = vmatpush1.msra.mxu0 0.0
    %754 = vmatprep.subr.mxu0 0.0
    %755 = vmatpush1.msra.mxu0 0.0
    %756 = vmatprep.subr.mxu0 0.0
    %757 = vmatpush1.msra.mxu0 0.0
    %758 = vmatprep.subr.mxu0 0.0
    %759 = vmatpush1.msra.mxu0 0.0
    %760 = vmatprep.subr.mxu0 0.0
    %761 = vmatpush1.msra.mxu0 0.0
    %762 = vmatprep.subr.mxu0 0.0
    %763 = vmatpush1.msra.mxu0 0.0
    %764 = vmatprep.subr.mxu0 0.0
    %765 = vmatpush1.msra.mxu0 0.0
    %766 = vmatprep.subr.mxu0 0.0
    %767 = vmatpush1.msra.mxu0 0.0
    %768 = vmatprep.subr.mxu0 0.0
    %769 = vmatpush1.msra.mxu0 0.0
    %770 = vmatprep.subr.mxu0 0.0
    %771 = vmatpush1.msra.mxu0 0.0
    %772 = vmatprep.subr.mxu0 0.0
    %773 = vmatpush1.msra.mxu0 0.0
    %774 = vmatprep.subr.mxu0 0.0
    %775 = vmatpush1.msra.mxu0 0.0
    %776 = vmatprep.subr.mxu0 0.0
    %777 = vmatpush1.msra.mxu0 0.0
    %778 = vmatprep.subr.mxu0 0.0
    %779 = vmatpush1.msra.mxu0 0.0
    %780 = vmatprep.subr.mxu0 0.0
    %781 = vmatpush1.msra.mxu0 0.0
    %782 = vmatprep.mubr.f32.mxu0 0.0
    %783 = vmatmul.mubr.f32.gmra.mrb[0].mxu0 %v673
    %v784 = vpop.f32.mrb[0].mxu0
    %v785 = vadd.f32 %v711, %v784
    %v786 = vpop.f32.mrb[0].mxu0
    %v787 = vadd.f32 %v715, %v786
    %788 = vdwg.mxu0
    %v789 = vmax.f32 %v785, 0.0
    %v790 = vmax.f32 %v787, 0.0
    %v791 = vld [vmem:[#allocation11] sm:$0xff]
    %v792 = vld [vmem:[#allocation11 + $0x8] sm:$0xff]
    %v793 = vld [vmem:[#allocation11 + $0x10] sm:$0xff]
    %v794 = vld [vmem:[#allocation11 + $0x18] sm:$0xff]
    %v795 = vld [vmem:[#allocation11 + $0x20] sm:$0xff]
    %v796 = vld [vmem:[#allocation11 + $0x28] sm:$0xff]
    %v797 = vld [vmem:[#allocation11 + $0x30] sm:$0xff]
    %v798 = vld [vmem:[#allocation11 + $0x38] sm:$0xff]
    %v799 = vld [vmem:[#allocation11 + $0x40] sm:$0xff]
    %v800 = vld [vmem:[#allocation11 + $0x48] sm:$0xff]
    %v801 = vld [vmem:[#allocation11 + $0x50] sm:$0xff]
    %v802 = vld [vmem:[#allocation11 + $0x58] sm:$0xff]
    %v803 = vld [vmem:[#allocation11 + $0x60] sm:$0xff]
    %v804 = vld [vmem:[#allocation11 + $0x68] sm:$0xff]
    %v805 = vld [vmem:[#allocation11 + $0x70] sm:$0xff]
    %v806 = vld [vmem:[#allocation11 + $0x78] sm:$0xff]
    %v807 = vld [vmem:[#allocation11 + $0x80] sm:$0xff]
    %v808 = vld [vmem:[#allocation11 + $0x88] sm:$0xff]
    %v809 = vld [vmem:[#allocation11 + $0x90] sm:$0xff]
    %v810 = vld [vmem:[#allocation11 + $0x98] sm:$0xff]
    %v811 = vld [vmem:[#allocation11 + $0xa0] sm:$0xff]
    %v812 = vld [vmem:[#allocation11 + $0xa8] sm:$0xff]
    %v813 = vld [vmem:[#allocation11 + $0xb0] sm:$0xff]
    %v814 = vld [vmem:[#allocation11 + $0xb8] sm:$0xff]
    %v815 = vld [vmem:[#allocation11 + $0xc0] sm:$0xff]
    %v816 = vld [vmem:[#allocation11 + $0xc8] sm:$0xff]
    %v817 = vld [vmem:[#allocation11 + $0xd0] sm:$0xff]
    %v818 = vld [vmem:[#allocation11 + $0xd8] sm:$0xff]
    %v819 = vld [vmem:[#allocation11 + $0xe0] sm:$0xff]
    %v820 = vld [vmem:[#allocation11 + $0xe8] sm:$0xff]
    %v821 = vld [vmem:[#allocation11 + $0xf0] sm:$0xff]
    %v822 = vld [vmem:[#allocation11 + $0xf8] sm:$0xff]
    %v823 = vld [vmem:[%s10] sm:$0x1]
    %v825 = vlaneseq
    %v826 = vshrl.u32 %v825, 7
    %v827 = vsub.s32 0, %v826
    %v828 = vrot.slane %v823, %v827
    %830 = vmatprep.subr.mxu0 0.0
    %831 = vmatpush1.msra.mxu0 %v791
    %832 = vmatprep.subr.mxu0 0.0
    %833 = vmatpush1.msra.mxu0 %v792
    %834 = vmatprep.subr.mxu0 0.0
    %835 = vmatpush1.msra.mxu0 %v793
    %836 = vmatprep.subr.mxu0 0.0
    %837 = vmatpush1.msra.mxu0 %v794
    %838 = vmatprep.subr.mxu0 0.0
    %839 = vmatpush1.msra.mxu0 %v795
    %840 = vmatprep.subr.mxu0 0.0
    %841 = vmatpush1.msra.mxu0 %v796
    %842 = vmatprep.subr.mxu0 0.0
    %843 = vmatpush1.msra.mxu0 %v797
    %844 = vmatprep.subr.mxu0 0.0
    %845 = vmatpush1.msra.mxu0 %v798
    %846 = vmatprep.subr.mxu0 0.0
    %847 = vmatpush1.msra.mxu0 %v799
    %848 = vmatprep.subr.mxu0 0.0
    %849 = vmatpush1.msra.mxu0 %v800
    %850 = vmatprep.subr.mxu0 0.0
    %851 = vmatpush1.msra.mxu0 %v801
    %852 = vmatprep.subr.mxu0 0.0
    %853 = vmatpush1.msra.mxu0 %v802
    %854 = vmatprep.subr.mxu0 0.0
    %855 = vmatpush1.msra.mxu0 %v803
    %856 = vmatprep.subr.mxu0 0.0
    %857 = vmatpush1.msra.mxu0 %v804
    %858 = vmatprep.subr.mxu0 0.0
    %859 = vmatpush1.msra.mxu0 %v805
    %860 = vmatprep.subr.mxu0 0.0
    %861 = vmatpush1.msra.mxu0 %v806
    %862 = vmatprep.subr.mxu0 0.0
    %863 = vmatpush1.msra.mxu0 %v807
    %864 = vmatprep.subr.mxu0 0.0
    %865 = vmatpush1.msra.mxu0 %v808
    %866 = vmatprep.subr.mxu0 0.0
    %867 = vmatpush1.msra.mxu0 %v809
    %868 = vmatprep.subr.mxu0 0.0
    %869 = vmatpush1.msra.mxu0 %v810
    %870 = vmatprep.subr.mxu0 0.0
    %871 = vmatpush1.msra.mxu0 %v811
    %872 = vmatprep.subr.mxu0 0.0
    %873 = vmatpush1.msra.mxu0 %v812
    %874 = vmatprep.subr.mxu0 0.0
    %875 = vmatpush1.msra.mxu0 %v813
    %876 = vmatprep.subr.mxu0 0.0
    %877 = vmatpush1.msra.mxu0 %v814
    %878 = vmatprep.subr.mxu0 0.0
    %879 = vmatpush1.msra.mxu0 %v815
    %880 = vmatprep.subr.mxu0 0.0
    %881 = vmatpush1.msra.mxu0 %v816
    %882 = vmatprep.subr.mxu0 0.0
    %883 = vmatpush1.msra.mxu0 %v817
    %884 = vmatprep.subr.mxu0 0.0
    %885 = vmatpush1.msra.mxu0 %v818
    %886 = vmatprep.subr.mxu0 0.0
    %887 = vmatpush1.msra.mxu0 %v819
    %888 = vmatprep.subr.mxu0 0.0
    %889 = vmatpush1.msra.mxu0 %v820
    %890 = vmatprep.subr.mxu0 0.0
    %891 = vmatpush1.msra.mxu0 %v821
    %892 = vmatprep.subr.mxu0 0.0
    %893 = vmatpush1.msra.mxu0 %v822
    %894 = vmatprep.mubr.f32.mxu0 %v790
    %895 = vmatmul.mubr.f32.gmra.mrb[0].mxu0 %v789
    %v896 = vpop.f32.mrb[0].mxu0
    %v897 = vadd.f32 %v828, %v896
    %v898 = vpop.f32.mrb[0].mxu0
    %899 = vdwg.mxu0
    %900 = vmax.xlane.f32.xlu0 %v897
    %v901 = vpop.xlane.xlu0 %900
    %v902 = vsub.f32 %v897, %v901
    %v903 = vmul.f32 %v902, 1.442695
    %v904 = vpow.pop %v903
    %905 = vadd.xlane.f32.xlu0 %v904
    %v906 = vpop.xlane.xlu0 %905
    %v907 = vlog2.pop %v906
    %v908 = vmul.f32 %v907, 0.6931472
    %v909 = vsub.f32 %v902, %v908
    %910 = vst [vmem:[#allocation13] sm:$0xff] %v909
    // Predicated region
    $region70: #{tpu_custom_call.1} parent=1 // pred_check
      _
    $region71: #{tpu_custom_call.1} parent=1 // pred_check_branch
      %912 = sbr.rel (0) target = $region73
    $region72: #{tpu_custom_call.1} parent=1 // pred_region
      %s914 = ssub.s32 128, 128
      %915 = vsyncadd [#allocation4], %s914
      %s917 = sshll.u32 [#allocation13], 4
      %s918 = int_to_ptr.vmem [resolvable:$true] %s917
      %920 = dma.vmem_to_hbm [thread:$0]  %s918, 128, %s11, [#allocation4]
    $region73: #{tpu_custom_call.1} parent=1 // pred_fallthru
      _
    // Predicated region
    $region74: #{tpu_custom_call.1} parent=1 // pred_check
      _
    $region75: #{tpu_custom_call.1} parent=1 // pred_check_branch
      %922 = sbr.rel (0) target = $region77
    $region76: #{tpu_custom_call.1} parent=1 // pred_region
      %923 = dma.done [#allocation4], 128
    $region77: #{tpu_custom_call.1} parent=1 // pred_fallthru
      _
    %924 = vsyncpa [#allocation3], 1
    %925 = vsyncpa [#allocation6], 1
    %926 = vsyncpa [#allocation9], 1
    %927 = vsyncpa [#allocation12], 1
    %928 = vsyncpa [#allocation4], 1

</llo_original>
